<compile_context>
chip_gen: v6e
topology: v6e:2x2x1
jax: 0.10.0
libtpu: 0.0.40
codegen_flags: <defaults>
</compile_context>

<pallas_src>
import functools

import jax
import jax.numpy as jnp
from jax.experimental import pallas as pl
from jax.experimental.pallas import tpu as pltpu


def _round_up(x, m):
    return ((x + m - 1) // m) * m


def _choose_m_tiling(M, batch, max_tile=512):
    """Tile of the sampled-centroid axis: multiple of 8, <= max_tile, minimal padding.
    Keeps B * n_tiles >= 2 so both TensorCores on v7x get parallel work."""
    n_tiles = max(1, -(-M // max_tile))
    if batch * n_tiles < 2 and M >= 16:
        n_tiles = 2
    tile_m = _round_up(-(-M // n_tiles), 8)
    return tile_m, tile_m * n_tiles


def _choose_s_block(S, tile_m, max_rows=2048, max_blk=8):
    """Largest divisor of S (<= max_blk) such that s_blk*tile_m stays a modest matmul height."""
    cap = max(1, min(S, max_blk, max_rows // max(tile_m, 1)))
    for blk in range(cap, 0, -1):
        if S % blk == 0:
            return blk
    return 1


# ----------------------------------------------------------------------------
# Pallas kernel: rel-xyz prep + (1x1 conv -> folded BN -> ReLU) stack + pool over samples
# ----------------------------------------------------------------------------
def _mlp_pool_kernel(num_layers, s_blk, total_s, pool_mod, *refs):
    x_ref = refs[0]                                  # (s_blk, tile_m, C0p) f32 grouped points
    off_ref = refs[1]                                # (tile_m, C0p) f32 centroid (0 in feat chans)
    out_ref = refs[-1]                               # (tile_m, C_last_pad) f32 (resident over s)
    p = refs[2:-1]                                   # (w, bias) per layer

    tile_m = out_ref.shape[0]
    s_idx = pl.program_id(2)                         # sample-block index (reduction axis)

    x = x_ref[...]
    off = off_ref[...]
    # Fused local-coordinate shift; collapse (s_blk, tile_m) into one tall matmul M dim.
    h = (x - off[None, :, :]).reshape(s_blk * tile_m, x.shape[-1])

    for l in range(num_layers):
        w = p[2 * l][...]                            # f32 for layer 0, bf16 afterwards
        b = p[2 * l + 1][...]                        # (1, co_pad) f32 folded-BN bias
        z = jnp.dot(h.astype(w.dtype), w, preferred_element_type=jnp.float32)
        h = jnp.maximum(z + b, 0.0)                  # 1x1 conv == matmul, eval-BN scale in w

    # Pool the s_blk sample slices in-register before touching the output tile.
    pooled = h[0:tile_m, :]
    for i in range(1, s_blk):
        sl = h[i * tile_m:(i + 1) * tile_m, :]
        pooled = jnp.maximum(pooled, sl) if pool_mod == "max" else pooled + sl

    @pl.when(s_idx == 0)
    def _():
        out_ref[...] = pooled

    @pl.when(s_idx > 0)
    def _():
        if pool_mod == "max":
            out_ref[...] = jnp.maximum(out_ref[...], pooled)
        else:                                        # avg
            out_ref[...] = out_ref[...] + pooled

    if pool_mod == "avg":
        @pl.when(s_idx == pl.num_programs(2) - 1)
        def _():
            out_ref[...] = out_ref[...] * (1.0 / float(total_s))


def mlp_and_pool(x, offsets, layer_params, *, tile_m, s_blk, M, pool_mod,
                 use_xyz, normalize_xyz, radius):
    """x: (B, S, M_pad, C0p) f32 grouped points (channels padded only to 8).
    offsets: (B, M_pad, C0p) f32 centroid xyz in channels 0:3 (zeros elsewhere).
    layer_params: list of (w (ci,co), bn_scale (1,co), bn_bias (1,co)) f32.
    Returns (B, M, C_last) f32 pooled over the sample axis."""
    B, S, M_pad, C0p = x.shape
    assert M_pad % tile_m == 0 and tile_m % 8 == 0 and S % s_blk == 0
    num_layers = len(layer_params)
    chans = [layer_params[0][0].shape[0]] + [w.shape[1] for (w, _, _) in layer_params]
    C_last = chans[-1]
    # VMEM-internal widths padded to 128 lanes (full MXU tiles, unmasked stores).
    # (For layers whose true width is >=256 a 256-alignment would feed v6e/v7x MXUs better.)
    cpad = [C0p] + [_round_up(c, 128) for c in chans[1:]]

    n_s_blocks = S // s_blk
    x_spec_kwargs = {}
    if n_s_blocks > 2:
        # per-step compute is short; a 3rd buffer hides more of the x DMA latency.
        x_spec_kwargs["pipeline_mode"] = pl.Buffered(3)

    in_specs = [
        pl.BlockSpec((None, s_blk, tile_m, C0p), lambda b, mt, s: (b, s, mt, 0),
                     **x_spec_kwargs),
        pl.BlockSpec((None, tile_m, C0p), lambda b, mt, s: (b, mt, 0)),
    ]

    flat = []
    for l, (w, sc, bi) in enumerate(layer_params):
        ci, co = w.shape
        w_eff = w * sc                                         # fold eval-mode BN scale into w
        if l == 0 and use_xyz and normalize_xyz:
            w_eff = w_eff.at[:3, :].multiply(1.0 / radius)     # fold xyz/radius into layer-0 rows
        wdt = jnp.float32 if l == 0 else jnp.bfloat16
        wp = jnp.zeros((cpad[l], cpad[l + 1]), wdt).at[:ci, :co].set(w_eff.astype(wdt))
        bp = jnp.zeros((1, cpad[l + 1]), jnp.float32).at[:, :co].set(bi)
        for arr in (wp, bp):
            flat.append(arr)
            in_specs.append(pl.BlockSpec(arr.shape, lambda b, mt, s: (0, 0)))

    kernel = functools.partial(_mlp_pool_kernel, num_layers, s_blk, S, pool_mod)
    out = pl.pallas_call(
        kernel,
        out_shape=jax.ShapeDtypeStruct((B, M_pad, cpad[-1]), jnp.float32),
        grid=(B, M_pad // tile_m, n_s_blocks),
        in_specs=in_specs,
        out_specs=pl.BlockSpec((None, tile_m, cpad[-1]), lambda b, mt, s: (b, mt, 0)),
        compiler_params=pltpu.CompilerParams(
            dimension_semantics=("parallel", "parallel", "arbitrary"),
            vmem_limit_bytes=48 * 1024 * 1024,   # under v7x's 64 MiB physical; ample on v5e/v6e
        ),
    )(x, offsets, *flat)
    return out[:, :M, :C_last]                       # drop M / channel padding


# ----------------------------------------------------------------------------
# Plain-JAX glue: FPS, ball query, grouping (data-dependent gathers)
# TODO(synk): tile ball_query over N and move FPS into a Pallas kernel for production sizes.
# ----------------------------------------------------------------------------
def furthest_point_sample(xyz, npoint):
    """xyz: (B, N, 3) -> indices (B, npoint) int32. Matches pointnet2 CUDA (start at 0)."""
    B, N, _ = xyz.shape

    def body(i, state):
        indices, dists, farthest = state
        indices = indices.at[:, i].set(farthest)
        centroid = jnp.take_along_axis(xyz, farthest[:, None, None], axis=1)  # (B,1,3)
        d = jnp.sum((xyz - centroid) ** 2, axis=-1)                           # (B,N)
        dists = jnp.minimum(dists, d)
        farthest = jnp.argmax(dists, axis=-1).astype(jnp.int32)
        return indices, dists, farthest

    init = (jnp.zeros((B, npoint), jnp.int32),
            jnp.full((B, N), 1e10, jnp.float32),
            jnp.zeros((B,), jnp.int32))
    indices, _, _ = jax.lax.fori_loop(0, npoint, body, init)
    return indices


def ball_query(radius, nsample, xyz, new_xyz):
    """Matches pointnet2 CUDA ball_query: first `nsample` in-ball points (index order);
    remaining slots padded with the first in-ball index (0 if the ball is empty)."""
    B, N, _ = xyz.shape
    diff = new_xyz[:, :, None, :] - xyz[:, None, :, :]
    sqdist = jnp.sum(diff * diff, axis=-1)                      # (B, M, N)
    in_ball = sqdist < radius * radius
    key = jnp.where(in_ball, jnp.arange(N, dtype=jnp.int32), jnp.int32(N))
    neg_top, idx = jax.lax.top_k(-key, nsample)                 # smallest keys == first in-ball
    valid = neg_top > -N
    first = jnp.where(valid[..., :1], idx[..., :1], 0)
    return jnp.where(valid, idx, first).astype(jnp.int32)       # (B, M, nsample)


def group_points_padded(radius, nsample, xyz, new_xyz, features_cl, M_pad, C0p, use_xyz=True):
    """Gather grouped points directly in sample-major layout with only 8-aligned channels:
    returns grouped (B, nsample, M_pad, C0p) f32 and centroid offsets (B, M_pad, C0p) f32
    (xyz in channels 0:3, zeros elsewhere). The rel-xyz subtraction happens in the kernel."""
    B, N, _ = xyz.shape
    M = new_xyz.shape[1]
    S = nsample

    idx = ball_query(radius, nsample, xyz, new_xyz)             # (B, M, S)
    idx = jnp.transpose(idx, (0, 2, 1))                         # (B, S, M) sample-major (tiny)
    idx = jnp.pad(idx, ((0, 0), (0, 0), (0, M_pad - M)))        # padded centroids -> junk rows

    if features_cl is not None:
        src = jnp.concatenate([xyz, features_cl], axis=-1) if use_xyz else features_cl
    else:
        assert use_xyz
        src = xyz
    C_in = src.shape[-1]
    src = jnp.pad(src, ((0, 0), (0, 0), (0, C0p - C_in)))       # pad channels at the tiny source

    flat = idx.reshape(B, S * M_pad)
    grouped = jnp.take_along_axis(src, flat[..., None], axis=1).reshape(B, S, M_pad, C0p)

    if use_xyz:
        off = jnp.pad(new_xyz, ((0, 0), (0, M_pad - M), (0, C0p - 3)))
    else:
        off = jnp.zeros((B, M_pad, C0p), jnp.float32)
    return grouped.astype(jnp.float32), off.astype(jnp.float32)


# ----------------------------------------------------------------------------
# Module: deterministic parameter init + forward
# ----------------------------------------------------------------------------
def init_params(key, mlp_channels, use_xyz):
    """Per scale, per layer: 1x1 conv weight (C_in, C_out) + folded eval-mode BN (scale, bias)."""
    params_all = []
    for spec in mlp_channels:
        spec = list(spec)
        if use_xyz:
            spec = [spec[0] + 3] + spec[1:]
        layers = []
        for c_in, c_out in zip(spec[:-1], spec[1:]):
            key, k1 = jax.random.split(key)
            w = 0.1 * jax.random.normal(k1, (c_in, c_out), jnp.float32)
            gamma = 1.0 + 0.01 * jnp.arange(c_out, dtype=jnp.float32)
            beta = 0.01 * jnp.arange(c_out, dtype=jnp.float32)
            run_mean = jnp.zeros((c_out,), jnp.float32)
            run_var = jnp.ones((c_out,), jnp.float32)
            scale = gamma / jnp.sqrt(run_var + 1e-5)
            bias = beta - run_mean * scale
            layers.append((w, scale[None, :], bias[None, :]))
        params_all.append(layers)
    return params_all


def pointnet_sa_msg_forward(points_xyz, features, params_all, *, num_point,
                            radii, sample_nums, use_xyz=True, pool_mod="max",
                            normalize_xyz=False, indices=None):
    """points_xyz: (B,N,3), features: (B,C,N) or None.
    Returns new_xyz (B,M,3), new_features (B, sum_k(mlp[k][-1]), M), indices (B,M)."""
    B, N, _ = points_xyz.shape
    M = num_point
    if indices is None:
        indices = furthest_point_sample(points_xyz, M)                         # (B, M)
    new_xyz = jnp.take_along_axis(points_xyz, indices[..., None], axis=1)      # (B, M, 3)
    features_cl = None if features is None else jnp.transpose(features, (0, 2, 1))

    tile_m, M_pad = _choose_m_tiling(M, B)

    outs = []
    for i, (radius, nsample) in enumerate(zip(radii, sample_nums)):
        layer_params = params_all[i]
        C_in = layer_params[0][0].shape[0]
        C0p = _round_up(C_in, 8)            # only 8-align the HBM channel dim (block == full dim)
        s_blk = _choose_s_block(nsample, tile_m)
        x, off = group_points_padded(radius, nsample, points_xyz, new_xyz, features_cl,
                                     M_pad, C0p, use_xyz)                      # f32, no 128 pad
        pooled = mlp_and_pool(x, off, layer_params, tile_m=tile_m, s_blk=s_blk, M=M,
                              pool_mod=pool_mod, use_xyz=use_xyz,
                              normalize_xyz=normalize_xyz, radius=radius)      # (B,M,C_last)
        # TODO(synk): emit channel-major output from the kernel (finalize-time XLU transpose)
        #             to remove this XLA transpose pass over the pooled result.
        outs.append(jnp.transpose(pooled, (0, 2, 1)))                          # (B,C_last,M)

    new_features = jnp.concatenate(outs, axis=1)                               # (B, sum_C, M)
    return new_xyz, new_features, indices


# ----------------------------------------------------------------------------
if __name__ == "__main__":
    key = jax.random.PRNGKey(0)
    kx, kf, kp = jax.random.split(key, 3)

    B, N, C = 2, 16, 4
    num_point = 8
    radii = [0.2, 0.4]
    sample_nums = [4, 8]
    mlp_channels = [[C, 16, 32], [C, 16, 64]]   # use_xyz adds +3 to the first channel

    points_xyz = jax.random.uniform(kx, (B, N, 3), jnp.float32)
    features = jax.random.normal(kf, (B, C, N), jnp.float32)

    params_all = init_params(kp, mlp_channels, use_xyz=True)

    fwd = jax.jit(functools.partial(
        pointnet_sa_msg_forward,
        num_point=num_point, radii=radii, sample_nums=sample_nums,
        use_xyz=True, pool_mod="max", normalize_xyz=False))

    new_xyz, new_features, indices = fwd(points_xyz, features, params_all)
    jax.block_until_ready((new_xyz, new_features, indices))

    assert new_xyz.shape == (B, num_point, 3)
    assert new_features.shape == (B, 32 + 64, num_point)
    assert indices.shape == (B, num_point)
    print("KERNEL_OK")
</pallas_src>

<mosaic_0001>
module attributes {stable_mosaic.version = 11 : i64} {
  func.func @_mlp_pool_kernel(%arg0: i32, %arg1: i32, %arg2: i32, %arg3: memref<1x4x8x8xf32, #tpu.memory_space<vmem>>, %arg4: memref<1x8x8xf32, #tpu.memory_space<vmem>>, %arg5: memref<8x128xf32, #tpu.memory_space<vmem>>, %arg6: memref<1x128xf32, #tpu.memory_space<vmem>>, %arg7: memref<128x128xbf16, #tpu.memory_space<vmem>>, %arg8: memref<1x128xf32, #tpu.memory_space<vmem>>, %arg9: memref<1x8x128xf32, #tpu.memory_space<vmem>>) attributes {dimension_semantics = [#tpu.dimension_semantics<parallel>, #tpu.dimension_semantics<parallel>, #tpu.dimension_semantics<arbitrary>], iteration_bounds = array<i64: 2, 1, 1>, scalar_prefetch = 0 : i64, scratch_operands = 0 : i64, tpu.core_type = #tpu.core_type<tc>, window_params = [{transform_indices = @transform_0, window_bounds = array<i64: 1, 4, 8, 8>}, {transform_indices = @transform_1, window_bounds = array<i64: 1, 8, 8>}, {pipeline_mode = #tpu.pipeline_mode<synchronous>, transform_indices = @transform_2, window_bounds = array<i64: 8, 128>}, {pipeline_mode = #tpu.pipeline_mode<synchronous>, transform_indices = @transform_3, window_bounds = array<i64: 1, 128>}, {pipeline_mode = #tpu.pipeline_mode<synchronous>, transform_indices = @transform_4, window_bounds = array<i64: 128, 128>}, {pipeline_mode = #tpu.pipeline_mode<synchronous>, transform_indices = @transform_5, window_bounds = array<i64: 1, 128>}, {transform_indices = @transform_6, window_bounds = array<i64: 1, 8, 128>}]} {
    %c0 = arith.constant 0 : index
    %c0_0 = arith.constant 0 : index
    %c0_1 = arith.constant 0 : index
    %c0_2 = arith.constant 0 : index
    %0 = vector.load %arg3[%c0, %c0_0, %c0_1, %c0_2] : memref<1x4x8x8xf32, #tpu.memory_space<vmem>>, vector<1x4x8x8xf32>
    %1 = vector.shape_cast %0 : vector<1x4x8x8xf32> to vector<4x8x8xf32>
    %c0_3 = arith.constant 0 : index
    %c0_4 = arith.constant 0 : index
    %c0_5 = arith.constant 0 : index
    %2 = vector.load %arg4[%c0_3, %c0_4, %c0_5] : memref<1x8x8xf32, #tpu.memory_space<vmem>>, vector<1x8x8xf32>
    %3 = vector.shape_cast %2 : vector<1x8x8xf32> to vector<8x8xf32>
    %4 = vector.shape_cast %3 : vector<8x8xf32> to vector<1x8x8xf32>
    %5 = vector.broadcast %4 : vector<1x8x8xf32> to vector<4x8x8xf32>
    %6 = arith.subf %1, %5 : vector<4x8x8xf32>
    %7 = vector.shape_cast %6 : vector<4x8x8xf32> to vector<32x8xf32>
    %c0_6 = arith.constant 0 : index
    %c0_7 = arith.constant 0 : index
    %8 = vector.load %arg5[%c0_6, %c0_7] : memref<8x128xf32, #tpu.memory_space<vmem>>, vector<8x128xf32>
    %c0_8 = arith.constant 0 : index
    %c0_9 = arith.constant 0 : index
    %9 = vector.load %arg6[%c0_8, %c0_9] : memref<1x128xf32, #tpu.memory_space<vmem>>, vector<1x128xf32>
    %cst = arith.constant dense<0.000000e+00> : vector<32x128xf32>
    %10 = tpu.matmul %7, %8, %cst {dimension_numbers = #tpu.dot_dimension_numbers<[1], [0], [0], [1], [0, 0, 1, 1], [], []>} : vector<32x8xf32>, vector<8x128xf32>, vector<32x128xf32> -> vector<32x128xf32>
    %11 = vector.broadcast %9 : vector<1x128xf32> to vector<32x128xf32>
    %12 = arith.addf %10, %11 : vector<32x128xf32>
    %cst_10 = arith.constant 0.000000e+00 : f32
    %13 = vector.broadcast %cst_10 : f32 to vector<32x128xf32>
    %14 = arith.maximumf %12, %13 : vector<32x128xf32>
    %c0_11 = arith.constant 0 : index
    %c0_12 = arith.constant 0 : index
    %15 = vector.load %arg7[%c0_11, %c0_12] : memref<128x128xbf16, #tpu.memory_space<vmem>>, vector<128x128xbf16>
    %c0_13 = arith.constant 0 : index
    %c0_14 = arith.constant 0 : index
    %16 = vector.load %arg8[%c0_13, %c0_14] : memref<1x128xf32, #tpu.memory_space<vmem>>, vector<1x128xf32>
    %17 = arith.truncf %14 : vector<32x128xf32> to vector<32x128xbf16>
    %cst_15 = arith.constant dense<0.000000e+00> : vector<32x128xf32>
    %18 = tpu.matmul %17, %15, %cst_15 {dimension_numbers = #tpu.dot_dimension_numbers<[1], [0], [0], [1], [0, 0, 1, 1], [], []>} : vector<32x128xbf16>, vector<128x128xbf16>, vector<32x128xf32> -> vector<32x128xf32>
    %19 = vector.broadcast %16 : vector<1x128xf32> to vector<32x128xf32>
    %20 = arith.addf %18, %19 : vector<32x128xf32>
    %cst_16 = arith.constant 0.000000e+00 : f32
    %21 = vector.broadcast %cst_16 : f32 to vector<32x128xf32>
    %22 = arith.maximumf %20, %21 : vector<32x128xf32>
    %23 = vector.extract_strided_slice %22 {offsets = [0, 0], sizes = [8, 128], strides = [1, 1]} : vector<32x128xf32> to vector<8x128xf32>
    %24 = vector.extract_strided_slice %22 {offsets = [8, 0], sizes = [8, 128], strides = [1, 1]} : vector<32x128xf32> to vector<8x128xf32>
    %25 = arith.maximumf %23, %24 : vector<8x128xf32>
    %26 = vector.extract_strided_slice %22 {offsets = [16, 0], sizes = [8, 128], strides = [1, 1]} : vector<32x128xf32> to vector<8x128xf32>
    %27 = arith.maximumf %25, %26 : vector<8x128xf32>
    %28 = vector.extract_strided_slice %22 {offsets = [24, 0], sizes = [8, 128], strides = [1, 1]} : vector<32x128xf32> to vector<8x128xf32>
    %29 = arith.maximumf %27, %28 : vector<8x128xf32>
    %c0_i32 = arith.constant 0 : i32
    %30 = arith.cmpi eq, %arg2, %c0_i32 : i32
    %31 = arith.extui %30 : i1 to i32
    %c0_i32_17 = arith.constant 0 : i32
    %32 = arith.cmpi ne, %31, %c0_i32_17 : i32
    scf.if %32 {
      %c0_20 = arith.constant 0 : index
      %c0_21 = arith.constant 0 : index
      %c0_22 = arith.constant 0 : index
      %36 = vector.load %arg9[%c0_20, %c0_21, %c0_22] : memref<1x8x128xf32, #tpu.memory_space<vmem>>, vector<1x8x128xf32>
      %37 = vector.shape_cast %36 : vector<1x8x128xf32> to vector<8x128xf32>
      %38 = vector.shape_cast %29 : vector<8x128xf32> to vector<1x8x128xf32>
      tpu.vector_store %arg9[%c0_20, %c0_21, %c0_22], %38 {strides = array<i32>} : memref<1x8x128xf32, #tpu.memory_space<vmem>>, vector<1x8x128xf32>,
    } else {
    }
    %c0_i32_18 = arith.constant 0 : i32
    %33 = arith.cmpi sgt, %arg2, %c0_i32_18 : i32
    %34 = arith.extui %33 : i1 to i32
    %c0_i32_19 = arith.constant 0 : i32
    %35 = arith.cmpi ne, %34, %c0_i32_19 : i32
    scf.if %35 {
      %c0_20 = arith.constant 0 : index
      %c0_21 = arith.constant 0 : index
      %c0_22 = arith.constant 0 : index
      %36 = vector.load %arg9[%c0_20, %c0_21, %c0_22] : memref<1x8x128xf32, #tpu.memory_space<vmem>>, vector<1x8x128xf32>
      %37 = vector.shape_cast %36 : vector<1x8x128xf32> to vector<8x128xf32>
      %38 = arith.maximumf %37, %29 : vector<8x128xf32>
      %c0_23 = arith.constant 0 : index
      %c0_24 = arith.constant 0 : index
      %c0_25 = arith.constant 0 : index
      %39 = vector.load %arg9[%c0_23, %c0_24, %c0_25] : memref<1x8x128xf32, #tpu.memory_space<vmem>>, vector<1x8x128xf32>
      %40 = vector.shape_cast %39 : vector<1x8x128xf32> to vector<8x128xf32>
      %41 = vector.shape_cast %38 : vector<8x128xf32> to vector<1x8x128xf32>
      tpu.vector_store %arg9[%c0_23, %c0_24, %c0_25], %41 {strides = array<i32>} : memref<1x8x128xf32, #tpu.memory_space<vmem>>, vector<1x8x128xf32>,
    } else {
    }
    return
  }
  func.func @transform_0(%arg0: i32, %arg1: i32, %arg2: i32) -> (i32, i32, i32, i32) {
    %c0_i32 = arith.constant 0 : i32
    %c0_i32_0 = arith.constant 0 : i32
    return %arg0, %arg2, %arg1, %c0_i32 : i32, i32, i32, i32
  }
  func.func @transform_1(%arg0: i32, %arg1: i32, %arg2: i32) -> (i32, i32, i32) {
    %c0_i32 = arith.constant 0 : i32
    %c0_i32_0 = arith.constant 0 : i32
    return %arg0, %arg1, %c0_i32 : i32, i32, i32
  }
  func.func @transform_2(%arg0: i32, %arg1: i32, %arg2: i32) -> (i32, i32) {
    %c0_i32 = arith.constant 0 : i32
    %c0_i32_0 = arith.constant 0 : i32
    %c0_i32_1 = arith.constant 0 : i32
    return %c0_i32, %c0_i32_0 : i32, i32
  }
  func.func @transform_3(%arg0: i32, %arg1: i32, %arg2: i32) -> (i32, i32) {
    %c0_i32 = arith.constant 0 : i32
    %c0_i32_0 = arith.constant 0 : i32
    %c0_i32_1 = arith.constant 0 : i32
    return %c0_i32, %c0_i32_0 : i32, i32
  }
  func.func @transform_4(%arg0: i32, %arg1: i32, %arg2: i32) -> (i32, i32) {
    %c0_i32 = arith.constant 0 : i32
    %c0_i32_0 = arith.constant 0 : i32
    %c0_i32_1 = arith.constant 0 : i32
    return %c0_i32, %c0_i32_0 : i32, i32
  }
  func.func @transform_5(%arg0: i32, %arg1: i32, %arg2: i32) -> (i32, i32) {
    %c0_i32 = arith.constant 0 : i32
    %c0_i32_0 = arith.constant 0 : i32
    %c0_i32_1 = arith.constant 0 : i32
    return %c0_i32, %c0_i32_0 : i32, i32
  }
  func.func @transform_6(%arg0: i32, %arg1: i32, %arg2: i32) -> (i32, i32, i32) {
    %c0_i32 = arith.constant 0 : i32
    %c0_i32_0 = arith.constant 0 : i32
    return %arg0, %arg1, %c0_i32 : i32, i32, i32
  }
}

module attributes {stable_mosaic.version = 11 : i64} {
  func.func @_mlp_pool_kernel(%arg0: i32, %arg1: i32, %arg2: i32, %arg3: memref<1x8x8x8xf32, #tpu.memory_space<vmem>>, %arg4: memref<1x8x8xf32, #tpu.memory_space<vmem>>, %arg5: memref<8x128xf32, #tpu.memory_space<vmem>>, %arg6: memref<1x128xf32, #tpu.memory_space<vmem>>, %arg7: memref<128x128xbf16, #tpu.memory_space<vmem>>, %arg8: memref<1x128xf32, #tpu.memory_space<vmem>>, %arg9: memref<1x8x128xf32, #tpu.memory_space<vmem>>) attributes {dimension_semantics = [#tpu.dimension_semantics<parallel>, #tpu.dimension_semantics<parallel>, #tpu.dimension_semantics<arbitrary>], iteration_bounds = array<i64: 2, 1, 1>, scalar_prefetch = 0 : i64, scratch_operands = 0 : i64, tpu.core_type = #tpu.core_type<tc>, window_params = [{transform_indices = @transform_0, window_bounds = array<i64: 1, 8, 8, 8>}, {transform_indices = @transform_1, window_bounds = array<i64: 1, 8, 8>}, {pipeline_mode = #tpu.pipeline_mode<synchronous>, transform_indices = @transform_2, window_bounds = array<i64: 8, 128>}, {pipeline_mode = #tpu.pipeline_mode<synchronous>, transform_indices = @transform_3, window_bounds = array<i64: 1, 128>}, {pipeline_mode = #tpu.pipeline_mode<synchronous>, transform_indices = @transform_4, window_bounds = array<i64: 128, 128>}, {pipeline_mode = #tpu.pipeline_mode<synchronous>, transform_indices = @transform_5, window_bounds = array<i64: 1, 128>}, {transform_indices = @transform_6, window_bounds = array<i64: 1, 8, 128>}]} {
    %c0 = arith.constant 0 : index
    %c0_0 = arith.constant 0 : index
    %c0_1 = arith.constant 0 : index
    %c0_2 = arith.constant 0 : index
    %0 = vector.load %arg3[%c0, %c0_0, %c0_1, %c0_2] : memref<1x8x8x8xf32, #tpu.memory_space<vmem>>, vector<1x8x8x8xf32>
    %1 = vector.shape_cast %0 : vector<1x8x8x8xf32> to vector<8x8x8xf32>
    %c0_3 = arith.constant 0 : index
    %c0_4 = arith.constant 0 : index
    %c0_5 = arith.constant 0 : index
    %2 = vector.load %arg4[%c0_3, %c0_4, %c0_5] : memref<1x8x8xf32, #tpu.memory_space<vmem>>, vector<1x8x8xf32>
    %3 = vector.shape_cast %2 : vector<1x8x8xf32> to vector<8x8xf32>
    %4 = vector.shape_cast %3 : vector<8x8xf32> to vector<1x8x8xf32>
    %5 = vector.broadcast %4 : vector<1x8x8xf32> to vector<8x8x8xf32>
    %6 = arith.subf %1, %5 : vector<8x8x8xf32>
    %7 = vector.shape_cast %6 : vector<8x8x8xf32> to vector<64x8xf32>
    %c0_6 = arith.constant 0 : index
    %c0_7 = arith.constant 0 : index
    %8 = vector.load %arg5[%c0_6, %c0_7] : memref<8x128xf32, #tpu.memory_space<vmem>>, vector<8x128xf32>
    %c0_8 = arith.constant 0 : index
    %c0_9 = arith.constant 0 : index
    %9 = vector.load %arg6[%c0_8, %c0_9] : memref<1x128xf32, #tpu.memory_space<vmem>>, vector<1x128xf32>
    %cst = arith.constant dense<0.000000e+00> : vector<64x128xf32>
    %10 = tpu.matmul %7, %8, %cst {dimension_numbers = #tpu.dot_dimension_numbers<[1], [0], [0], [1], [0, 0, 1, 1], [], []>} : vector<64x8xf32>, vector<8x128xf32>, vector<64x128xf32> -> vector<64x128xf32>
    %11 = vector.broadcast %9 : vector<1x128xf32> to vector<64x128xf32>
    %12 = arith.addf %10, %11 : vector<64x128xf32>
    %cst_10 = arith.constant 0.000000e+00 : f32
    %13 = vector.broadcast %cst_10 : f32 to vector<64x128xf32>
    %14 = arith.maximumf %12, %13 : vector<64x128xf32>
    %c0_11 = arith.constant 0 : index
    %c0_12 = arith.constant 0 : index
    %15 = vector.load %arg7[%c0_11, %c0_12] : memref<128x128xbf16, #tpu.memory_space<vmem>>, vector<128x128xbf16>
    %c0_13 = arith.constant 0 : index
    %c0_14 = arith.constant 0 : index
    %16 = vector.load %arg8[%c0_13, %c0_14] : memref<1x128xf32, #tpu.memory_space<vmem>>, vector<1x128xf32>
    %17 = arith.truncf %14 : vector<64x128xf32> to vector<64x128xbf16>
    %cst_15 = arith.constant dense<0.000000e+00> : vector<64x128xf32>
    %18 = tpu.matmul %17, %15, %cst_15 {dimension_numbers = #tpu.dot_dimension_numbers<[1], [0], [0], [1], [0, 0, 1, 1], [], []>} : vector<64x128xbf16>, vector<128x128xbf16>, vector<64x128xf32> -> vector<64x128xf32>
    %19 = vector.broadcast %16 : vector<1x128xf32> to vector<64x128xf32>
    %20 = arith.addf %18, %19 : vector<64x128xf32>
    %cst_16 = arith.constant 0.000000e+00 : f32
    %21 = vector.broadcast %cst_16 : f32 to vector<64x128xf32>
    %22 = arith.maximumf %20, %21 : vector<64x128xf32>
    %23 = vector.extract_strided_slice %22 {offsets = [0, 0], sizes = [8, 128], strides = [1, 1]} : vector<64x128xf32> to vector<8x128xf32>
    %24 = vector.extract_strided_slice %22 {offsets = [8, 0], sizes = [8, 128], strides = [1, 1]} : vector<64x128xf32> to vector<8x128xf32>
    %25 = arith.maximumf %23, %24 : vector<8x128xf32>
    %26 = vector.extract_strided_slice %22 {offsets = [16, 0], sizes = [8, 128], strides = [1, 1]} : vector<64x128xf32> to vector<8x128xf32>
    %27 = arith.maximumf %25, %26 : vector<8x128xf32>
    %28 = vector.extract_strided_slice %22 {offsets = [24, 0], sizes = [8, 128], strides = [1, 1]} : vector<64x128xf32> to vector<8x128xf32>
    %29 = arith.maximumf %27, %28 : vector<8x128xf32>
    %30 = vector.extract_strided_slice %22 {offsets = [32, 0], sizes = [8, 128], strides = [1, 1]} : vector<64x128xf32> to vector<8x128xf32>
    %31 = arith.maximumf %29, %30 : vector<8x128xf32>
    %32 = vector.extract_strided_slice %22 {offsets = [40, 0], sizes = [8, 128], strides = [1, 1]} : vector<64x128xf32> to vector<8x128xf32>
    %33 = arith.maximumf %31, %32 : vector<8x128xf32>
    %34 = vector.extract_strided_slice %22 {offsets = [48, 0], sizes = [8, 128], strides = [1, 1]} : vector<64x128xf32> to vector<8x128xf32>
    %35 = arith.maximumf %33, %34 : vector<8x128xf32>
    %36 = vector.extract_strided_slice %22 {offsets = [56, 0], sizes = [8, 128], strides = [1, 1]} : vector<64x128xf32> to vector<8x128xf32>
    %37 = arith.maximumf %35, %36 : vector<8x128xf32>
    %c0_i32 = arith.constant 0 : i32
    %38 = arith.cmpi eq, %arg2, %c0_i32 : i32
    %39 = arith.extui %38 : i1 to i32
    %c0_i32_17 = arith.constant 0 : i32
    %40 = arith.cmpi ne, %39, %c0_i32_17 : i32
    scf.if %40 {
      %c0_20 = arith.constant 0 : index
      %c0_21 = arith.constant 0 : index
      %c0_22 = arith.constant 0 : index
      %44 = vector.load %arg9[%c0_20, %c0_21, %c0_22] : memref<1x8x128xf32, #tpu.memory_space<vmem>>, vector<1x8x128xf32>
      %45 = vector.shape_cast %44 : vector<1x8x128xf32> to vector<8x128xf32>
      %46 = vector.shape_cast %37 : vector<8x128xf32> to vector<1x8x128xf32>
      tpu.vector_store %arg9[%c0_20, %c0_21, %c0_22], %46 {strides = array<i32>} : memref<1x8x128xf32, #tpu.memory_space<vmem>>, vector<1x8x128xf32>,
    } else {
    }
    %c0_i32_18 = arith.constant 0 : i32
    %41 = arith.cmpi sgt, %arg2, %c0_i32_18 : i32
    %42 = arith.extui %41 : i1 to i32
    %c0_i32_19 = arith.constant 0 : i32
    %43 = arith.cmpi ne, %42, %c0_i32_19 : i32
    scf.if %43 {
      %c0_20 = arith.constant 0 : index
      %c0_21 = arith.constant 0 : index
      %c0_22 = arith.constant 0 : index
      %44 = vector.load %arg9[%c0_20, %c0_21, %c0_22] : memref<1x8x128xf32, #tpu.memory_space<vmem>>, vector<1x8x128xf32>
      %45 = vector.shape_cast %44 : vector<1x8x128xf32> to vector<8x128xf32>
      %46 = arith.maximumf %45, %37 : vector<8x128xf32>
      %c0_23 = arith.constant 0 : index
      %c0_24 = arith.constant 0 : index
      %c0_25 = arith.constant 0 : index
      %47 = vector.load %arg9[%c0_23, %c0_24, %c0_25] : memref<1x8x128xf32, #tpu.memory_space<vmem>>, vector<1x8x128xf32>
      %48 = vector.shape_cast %47 : vector<1x8x128xf32> to vector<8x128xf32>
      %49 = vector.shape_cast %46 : vector<8x128xf32> to vector<1x8x128xf32>
      tpu.vector_store %arg9[%c0_23, %c0_24, %c0_25], %49 {strides = array<i32>} : memref<1x8x128xf32, #tpu.memory_space<vmem>>, vector<1x8x128xf32>,
    } else {
    }
    return
  }
  func.func @transform_0(%arg0: i32, %arg1: i32, %arg2: i32) -> (i32, i32, i32, i32) {
    %c0_i32 = arith.constant 0 : i32
    %c0_i32_0 = arith.constant 0 : i32
    return %arg0, %arg2, %arg1, %c0_i32 : i32, i32, i32, i32
  }
  func.func @transform_1(%arg0: i32, %arg1: i32, %arg2: i32) -> (i32, i32, i32) {
    %c0_i32 = arith.constant 0 : i32
    %c0_i32_0 = arith.constant 0 : i32
    return %arg0, %arg1, %c0_i32 : i32, i32, i32
  }
  func.func @transform_2(%arg0: i32, %arg1: i32, %arg2: i32) -> (i32, i32) {
    %c0_i32 = arith.constant 0 : i32
    %c0_i32_0 = arith.constant 0 : i32
    %c0_i32_1 = arith.constant 0 : i32
    return %c0_i32, %c0_i32_0 : i32, i32
  }
  func.func @transform_3(%arg0: i32, %arg1: i32, %arg2: i32) -> (i32, i32) {
    %c0_i32 = arith.constant 0 : i32
    %c0_i32_0 = arith.constant 0 : i32
    %c0_i32_1 = arith.constant 0 : i32
    return %c0_i32, %c0_i32_0 : i32, i32
  }
  func.func @transform_4(%arg0: i32, %arg1: i32, %arg2: i32) -> (i32, i32) {
    %c0_i32 = arith.constant 0 : i32
    %c0_i32_0 = arith.constant 0 : i32
    %c0_i32_1 = arith.constant 0 : i32
    return %c0_i32, %c0_i32_0 : i32, i32
  }
  func.func @transform_5(%arg0: i32, %arg1: i32, %arg2: i32) -> (i32, i32) {
    %c0_i32 = arith.constant 0 : i32
    %c0_i32_0 = arith.constant 0 : i32
    %c0_i32_1 = arith.constant 0 : i32
    return %c0_i32, %c0_i32_0 : i32, i32
  }
  func.func @transform_6(%arg0: i32, %arg1: i32, %arg2: i32) -> (i32, i32, i32) {
    %c0_i32 = arith.constant 0 : i32
    %c0_i32_0 = arith.constant 0 : i32
    return %arg0, %arg1, %c0_i32 : i32, i32, i32
  }
}

</mosaic_0001>

<llo_original>
// kernel: custom-call.8
$region0: #{custom-call.8}
  %s0 = inlined_call_operand.vmem [shape: f32[2,16], index: 0, kind: output, shape index: {}]

// kernel: pointnet_sa_msg_forward.2
$region0: #{pointnet_sa_msg_forward.2}
  #allocation0 [shape = 'u32[]', space=smem, size = 0x4, offset = 0x4, fixed_abs, tag = 'smem constant byte address 0x4 - core index']
  #allocation1 [shape = 'u32[144,128]{1,0:T(1,128)}', space=vmem, size = 0x12000, scoped, tag = 'internal scratch']
  %s0 = inlined_call_operand.vmem [shape: f32[2,4,8,8], index: 0, kind: input, shape index: {}]
  %s1 = inlined_call_operand.vmem [shape: f32[2,8,8], index: 1, kind: input, shape index: {}]
  %s2 = inlined_call_operand.vmem [shape: f32[8,128], index: 2, kind: input, shape index: {}]
  %s3 = inlined_call_operand.vmem [shape: f32[1,128], index: 3, kind: input, shape index: {}]
  %s4 = inlined_call_operand.vmem [shape: bf16[128,128], index: 4, kind: input, shape index: {}]
  %s5 = inlined_call_operand.vmem [shape: f32[1,128], index: 5, kind: input, shape index: {}]
  %s6 = inlined_call_operand.vmem [shape: f32[2,8,128], index: 6, kind: output, shape index: {}]
  %s7 = sld [smem:[#allocation0]]
  $region65: #{pointnet_sa_msg_forward.2} parent=0
    _
  %s9 = ssub.s32 1, %s7
  %s10 = scalar_select 0, %s9, %s7
  loop: start=0, step=1, limit=4
  $region2: #{pointnet_sa_msg_forward.2} parent=0 // loop_pre_header
    _
  $region3: #{pointnet_sa_msg_forward.2} parent=0 // loop_header
    %s12 = sphi 0, %s16
    %p13 = scmp.ge.s32.totalorder %s12, 4
    %s19 = sphi 0, %s38
    %s20 = sphi 0, %s34
    %s21 = sphi 0, %s30
    %s22 = sphi 0, %s19
    %s23 = sphi 0, %s20
    %s24 = sphi 0, %s21
    %s25 = sphi 0, %s22
    %s26 = sphi 0, %s23
    %s27 = sphi 0, %s24
    %s45 = sphi 0, %s47
    %s48 = sphi 0, %s45
    %s49 = sphi 0, %s48
    %s65 = sphi 0, %s49
    %s73 = sphi 0, %s75
    %s76 = sphi 0, %s73
    %s77 = sphi 0, %s76
    %s93 = sphi 0, %s77
    %s97 = sphi 0, %s97
    %s99 = sphi 0, %s97
    %s100 = sphi 0, %s99
    %s114 = sphi 0, %s100
    %s118 = sphi 0, %s118
    %s120 = sphi 0, %s118
    %s121 = sphi 0, %s120
    %s135 = sphi 0, %s121
    %s139 = sphi 0, %s139
    %s141 = sphi 0, %s139
    %s142 = sphi 0, %s141
    %s156 = sphi 0, %s142
    %s160 = sphi 0, %s160
    %s162 = sphi 0, %s160
    %s163 = sphi 0, %s162
    %s177 = sphi 0, %s163
    %s185 = sphi 0, %s187
    %s188 = sphi 0, %s185
    %s189 = sphi 0, %s188
    %s205 = sphi 0, %s189
  $region4: #{pointnet_sa_msg_forward.2} parent=0 // loop_header_branch
    %15 = sbr.rel (%p13) target = $region8
  $region5: #{pointnet_sa_msg_forward.2} parent=0 // loop_body
    %s17 = ssub.s32 %s12, 1
    %s18 = ssub.s32 %s12, 2
    %s28 = sadd.s32 1, %s21
    %p29 = scmp.ge.s32.totalorder %s28, 1
    %s30 = scalar_select %p29, 0, %s28
    %s31 = sadd.s32 1, %s20
    %s32 = scalar_select %p29, %s31, %s20
    %p33 = scmp.ge.s32.totalorder %s32, 1
    %s34 = scalar_select %p33, 0, %s32
    %s35 = sadd.s32 1, %s19
    %s36 = scalar_select %p33, %s35, %s19
    %p37 = scmp.ge.s32.totalorder %s36, 2
    %s38 = scalar_select %p37, 0, %s36
    %s39 = ssub.s32 %s19, %s38
    %s40 = ssub.s32 %s21, %s30
    %s41 = sor.u32 %s39, %s40
    %s42 = ssub.s32 %s20, %s34
    %s43 = sor.u32 %s41, %s42
    %p44 = scmp.eq.s32.totalorder %s43, 0
    %s46 = sadd.s32 %s45, 1
    %s47 = scalar_select %p44, %s45, %s46
    %p50 = pneg %p44
    %p51 = scmp.eq.s32.totalorder %s12, 1
    %p52 = por %p50, %p51
    %p53 = scmp.ne.s32.totalorder %s45, %s48
    %p54 = scmp.eq.s32.totalorder %s12, 0
    %p55 = por %p53, %p54
    %p56 = scmp.ne.s32.totalorder %s45, %s48
    %p57 = scmp.eq.s32.totalorder %s17, 1
    %p58 = por %p56, %p57
    %p59 = scmp.ne.s32.totalorder %s48, %s49
    %p60 = scmp.eq.s32.totalorder %s17, 0
    %p61 = por %p59, %p60
    %p62 = scmp.ne.s32.totalorder %s48, %s49
    %p63 = scmp.eq.s32.totalorder %s18, 1
    %p64 = por %p62, %p63
    %p66 = scmp.ne.s32.totalorder %s49, %s65
    %p67 = scmp.eq.s32.totalorder %s18, 0
    %p68 = por %p66, %p67
    %s69 = ssub.s32 %s19, %s38
    %s70 = ssub.s32 %s20, %s34
    %s71 = sor.u32 %s69, %s70
    %p72 = scmp.eq.s32.totalorder %s71, 0
    %s74 = sadd.s32 %s73, 1
    %s75 = scalar_select %p72, %s73, %s74
    %p78 = pneg %p72
    %p79 = scmp.eq.s32.totalorder %s12, 1
    %p80 = por %p78, %p79
    %p81 = scmp.ne.s32.totalorder %s73, %s76
    %p82 = scmp.eq.s32.totalorder %s12, 0
    %p83 = por %p81, %p82
    %p84 = scmp.ne.s32.totalorder %s73, %s76
    %p85 = scmp.eq.s32.totalorder %s17, 1
    %p86 = por %p84, %p85
    %p87 = scmp.ne.s32.totalorder %s76, %s77
    %p88 = scmp.eq.s32.totalorder %s17, 0
    %p89 = por %p87, %p88
    %p90 = scmp.ne.s32.totalorder %s76, %s77
    %p91 = scmp.eq.s32.totalorder %s18, 1
    %p92 = por %p90, %p91
    %p94 = scmp.ne.s32.totalorder %s77, %s93
    %p95 = scmp.eq.s32.totalorder %s18, 0
    %p96 = por %p94, %p95
    %s98 = sadd.s32 %s97, 1
    %p101 = scmp.eq.s32.totalorder %s12, 1
    %p102 = scmp.ne.s32.totalorder %s97, %s99
    %p103 = scmp.eq.s32.totalorder %s12, 0
    %p104 = por %p102, %p103
    %p105 = scmp.ne.s32.totalorder %s97, %s99
    %p106 = scmp.eq.s32.totalorder %s17, 1
    %p107 = por %p105, %p106
    %p108 = scmp.ne.s32.totalorder %s99, %s100
    %p109 = scmp.eq.s32.totalorder %s17, 0
    %p110 = por %p108, %p109
    %p111 = scmp.ne.s32.totalorder %s99, %s100
    %p112 = scmp.eq.s32.totalorder %s18, 1
    %p113 = por %p111, %p112
    %p115 = scmp.ne.s32.totalorder %s100, %s114
    %p116 = scmp.eq.s32.totalorder %s18, 0
    %p117 = por %p115, %p116
    %s119 = sadd.s32 %s118, 1
    %p122 = scmp.eq.s32.totalorder %s12, 1
    %p123 = scmp.ne.s32.totalorder %s118, %s120
    %p124 = scmp.eq.s32.totalorder %s12, 0
    %p125 = por %p123, %p124
    %p126 = scmp.ne.s32.totalorder %s118, %s120
    %p127 = scmp.eq.s32.totalorder %s17, 1
    %p128 = por %p126, %p127
    %p129 = scmp.ne.s32.totalorder %s120, %s121
    %p130 = scmp.eq.s32.totalorder %s17, 0
    %p131 = por %p129, %p130
    %p132 = scmp.ne.s32.totalorder %s120, %s121
    %p133 = scmp.eq.s32.totalorder %s18, 1
    %p134 = por %p132, %p133
    %p136 = scmp.ne.s32.totalorder %s121, %s135
    %p137 = scmp.eq.s32.totalorder %s18, 0
    %p138 = por %p136, %p137
    %s140 = sadd.s32 %s139, 1
    %p143 = scmp.eq.s32.totalorder %s12, 1
    %p144 = scmp.ne.s32.totalorder %s139, %s141
    %p145 = scmp.eq.s32.totalorder %s12, 0
    %p146 = por %p144, %p145
    %p147 = scmp.ne.s32.totalorder %s139, %s141
    %p148 = scmp.eq.s32.totalorder %s17, 1
    %p149 = por %p147, %p148
    %p150 = scmp.ne.s32.totalorder %s141, %s142
    %p151 = scmp.eq.s32.totalorder %s17, 0
    %p152 = por %p150, %p151
    %p153 = scmp.ne.s32.totalorder %s141, %s142
    %p154 = scmp.eq.s32.totalorder %s18, 1
    %p155 = por %p153, %p154
    %p157 = scmp.ne.s32.totalorder %s142, %s156
    %p158 = scmp.eq.s32.totalorder %s18, 0
    %p159 = por %p157, %p158
    %s161 = sadd.s32 %s160, 1
    %p164 = scmp.eq.s32.totalorder %s12, 1
    %p165 = scmp.ne.s32.totalorder %s160, %s162
    %p166 = scmp.eq.s32.totalorder %s12, 0
    %p167 = por %p165, %p166
    %p168 = scmp.ne.s32.totalorder %s160, %s162
    %p169 = scmp.eq.s32.totalorder %s17, 1
    %p170 = por %p168, %p169
    %p171 = scmp.ne.s32.totalorder %s162, %s163
    %p172 = scmp.eq.s32.totalorder %s17, 0
    %p173 = por %p171, %p172
    %p174 = scmp.ne.s32.totalorder %s162, %s163
    %p175 = scmp.eq.s32.totalorder %s18, 1
    %p176 = por %p174, %p175
    %p178 = scmp.ne.s32.totalorder %s163, %s177
    %p179 = scmp.eq.s32.totalorder %s18, 0
    %p180 = por %p178, %p179
    %s181 = ssub.s32 %s19, %s38
    %s182 = ssub.s32 %s20, %s34
    %s183 = sor.u32 %s181, %s182
    %p184 = scmp.eq.s32.totalorder %s183, 0
    %s186 = sadd.s32 %s185, 1
    %s187 = scalar_select %p184, %s185, %s186
    %p190 = pneg %p184
    %p191 = scmp.eq.s32.totalorder %s12, 1
    %p192 = por %p190, %p191
    %p193 = scmp.ne.s32.totalorder %s185, %s188
    %p194 = scmp.eq.s32.totalorder %s12, 0
    %p195 = por %p193, %p194
    %p196 = scmp.ne.s32.totalorder %s185, %s188
    %p197 = scmp.eq.s32.totalorder %s17, 1
    %p198 = por %p196, %p197
    %p199 = scmp.ne.s32.totalorder %s188, %s189
    %p200 = scmp.eq.s32.totalorder %s17, 0
    %p201 = por %p199, %p200
    %p202 = scmp.ne.s32.totalorder %s188, %s189
    %p203 = scmp.eq.s32.totalorder %s18, 1
    %p204 = por %p202, %p203
    %p206 = scmp.ne.s32.totalorder %s189, %s205
    %p207 = scmp.eq.s32.totalorder %s18, 0
    %p208 = por %p206, %p207
    %p209 = scmp.le.s32.totalorder 1, %s12
    %p210 = scmp.lt.s32.totalorder %s12, 3
    %p211 = pnand %p209, %p210
    %p212 = pneg %p211
    // Predicated region
    $region9: #{pointnet_sa_msg_forward.2} parent=5 // pred_check
      _
    $region10: #{pointnet_sa_msg_forward.2} parent=5 // pred_check_branch
      %214 = sbr.rel (%p211) target = $region12
    $region11: #{pointnet_sa_msg_forward.2} parent=5 // pred_region
      %s215 = ssub.s32 %s12, 1
      // Predicated region
      $region13: #{pointnet_sa_msg_forward.2} parent=11 // pred_check
        %p216 = pneg %p110
      $region14: #{pointnet_sa_msg_forward.2} parent=11 // pred_check_branch
        %218 = sbr.rel (%p216) target = $region16
      $region15: #{pointnet_sa_msg_forward.2} parent=11 // pred_region
        _
      $region16: #{pointnet_sa_msg_forward.2} parent=11 // pred_fallthru
        _
      // Predicated region
      $region17: #{pointnet_sa_msg_forward.2} parent=11 // pred_check
        %p219 = pneg %p131
      $region18: #{pointnet_sa_msg_forward.2} parent=11 // pred_check_branch
        %221 = sbr.rel (%p219) target = $region20
      $region19: #{pointnet_sa_msg_forward.2} parent=11 // pred_region
        _
      $region20: #{pointnet_sa_msg_forward.2} parent=11 // pred_fallthru
        _
      // Predicated region
      $region21: #{pointnet_sa_msg_forward.2} parent=11 // pred_check
        %p222 = pneg %p152
      $region22: #{pointnet_sa_msg_forward.2} parent=11 // pred_check_branch
        %224 = sbr.rel (%p222) target = $region24
      $region23: #{pointnet_sa_msg_forward.2} parent=11 // pred_region
        _
      $region24: #{pointnet_sa_msg_forward.2} parent=11 // pred_fallthru
        _
      // Predicated region
      $region25: #{pointnet_sa_msg_forward.2} parent=11 // pred_check
        %p225 = pneg %p173
      $region26: #{pointnet_sa_msg_forward.2} parent=11 // pred_check_branch
        %227 = sbr.rel (%p225) target = $region28
      $region27: #{pointnet_sa_msg_forward.2} parent=11 // pred_region
        _
      $region28: #{pointnet_sa_msg_forward.2} parent=11 // pred_fallthru
        _
    $region12: #{pointnet_sa_msg_forward.2} parent=5 // pred_fallthru
      _
    %p228 = scmp.lt.s32.totalorder %s12, 2
    // Predicated region
    $region29: #{pointnet_sa_msg_forward.2} parent=5 // pred_check
      %p229 = pneg %p228
    $region30: #{pointnet_sa_msg_forward.2} parent=5 // pred_check_branch
      %231 = sbr.rel (%p229) target = $region32
    $region31: #{pointnet_sa_msg_forward.2} parent=5 // pred_region
      // Predicated region
      $region33: #{pointnet_sa_msg_forward.2} parent=31 // pred_check
        %p232 = pneg %p55
      $region34: #{pointnet_sa_msg_forward.2} parent=31 // pred_check_branch
        %234 = sbr.rel (%p232) target = $region36
      $region35: #{pointnet_sa_msg_forward.2} parent=31 // pred_region
        %s235 = smul.u32 4, %s21
        %p236 = scmp.lt.s32.totalorder %s19, 1
        %s237 = scalar_select %p236, %s19, 1
        %p238 = scmp.lt.s32.totalorder %s235, 3
        %s239 = scalar_select %p238, %s235, 3
        %p240 = scmp.lt.s32.totalorder %s20, 0
        %s241 = scalar_select %p240, %s20, 0
        %s242 = sadd.s32 %s241, %s239
        %s243 = smul.addr %s237, 4
        %s244 = sadd.s32 %s242, %s243
        %s245 = smul.addr %s244, 8
        %s246 = scalar_lea.vmem %s0, %s245
        %s247 = smul.u32 4, %s21
      $region36: #{pointnet_sa_msg_forward.2} parent=31 // pred_fallthru
        _
      // Predicated region
      $region37: #{pointnet_sa_msg_forward.2} parent=31 // pred_check
        %p248 = pneg %p83
      $region38: #{pointnet_sa_msg_forward.2} parent=31 // pred_check_branch
        %250 = sbr.rel (%p248) target = $region40
      $region39: #{pointnet_sa_msg_forward.2} parent=31 // pred_region
        %p251 = scmp.lt.s32.totalorder %s19, 1
        %s252 = scalar_select %p251, %s19, 1
        %p253 = scmp.lt.s32.totalorder %s20, 0
        %s254 = scalar_select %p253, %s20, 0
        %s255 = sadd.s32 %s254, %s252
        %s256 = smul.addr %s255, 8
        %s257 = scalar_lea.vmem %s1, %s256
      $region40: #{pointnet_sa_msg_forward.2} parent=31 // pred_fallthru
        _
    $region32: #{pointnet_sa_msg_forward.2} parent=5 // pred_fallthru
      _
    %p258 = scmp.le.s32.totalorder 1, %s12
    %p259 = scmp.lt.s32.totalorder %s12, 3
    %p260 = pnand %p258, %p259
    %p261 = pneg %p260
    // Predicated region
    $region41: #{pointnet_sa_msg_forward.2} parent=5 // pred_check
      _
    $region42: #{pointnet_sa_msg_forward.2} parent=5 // pred_check_branch
      %263 = sbr.rel (%p260) target = $region44
    $region43: #{pointnet_sa_msg_forward.2} parent=5 // pred_region
      %s264 = ssub.s32 %s12, 1
      %s265 = smul.u32 4, %s24
      %p266 = scmp.lt.s32.totalorder %s22, 1
      %s267 = scalar_select %p266, %s22, 1
      %p268 = scmp.lt.s32.totalorder %s265, 3
      %s269 = scalar_select %p268, %s265, 3
      %p270 = scmp.lt.s32.totalorder %s23, 0
      %s271 = scalar_select %p270, %s23, 0
      %s272 = sadd.s32 %s271, %s269
      %s273 = smul.addr %s267, 4
      %s274 = sadd.s32 %s272, %s273
      %s275 = smul.addr %s274, 8
      %s276 = scalar_lea.vmem %s0, %s275
      %p277 = pneg %p61
      %p278 = pneg %p58
      %p279 = scmp.lt.s32.totalorder %s22, 1
      %s280 = scalar_select %p279, %s22, 1
      %p281 = scmp.lt.s32.totalorder %s23, 0
      %s282 = scalar_select %p281, %s23, 0
      %s283 = sadd.s32 %s282, %s280
      %s284 = smul.addr %s283, 8
      %s285 = scalar_lea.vmem %s1, %s284
      %p286 = pneg %p89
      %p287 = pneg %p86
      %p288 = pneg %p110
      %p289 = pneg %p107
      %p290 = pneg %p131
      %p291 = pneg %p128
      %p292 = pneg %p152
      %p293 = pneg %p149
      %p294 = pneg %p173
      %p295 = pneg %p170
      %p296 = pneg %p201
      %p297 = pneg %p198
      %p298 = scmp.lt.s32.totalorder %s22, 1
      %s299 = scalar_select %p298, %s22, 1
      %p300 = scmp.lt.s32.totalorder %s23, 0
      %s301 = scalar_select %p300, %s23, 0
      %s302 = sadd.s32 %s301, %s299
      %s303 = smul.addr %s302, 8
      %s304 = scalar_lea.vmem %s6, %s303
      %s305 = smul.u32 4, %s24
      %p306 = scmp.lt.s32.totalorder %s22, 1
      %s307 = scalar_select %p306, %s22, 1
      %p308 = scmp.lt.s32.totalorder %s305, 3
      %s309 = scalar_select %p308, %s305, 3
      %p310 = scmp.lt.s32.totalorder %s23, 0
      %s311 = scalar_select %p310, %s23, 0
      %s312 = sadd.s32 %s311, %s309
      %s313 = smul.addr %s307, 4
      %s314 = sadd.s32 %s312, %s313
      %s315 = smul.addr %s314, 8
      %s316 = scalar_lea.vmem %s0, %s315
      %s317 = smul.u32 4, %s24
      %p318 = scmp.lt.s32.totalorder %s22, 1
      %s319 = scalar_select %p318, %s22, 1
      %p320 = scmp.lt.s32.totalorder %s23, 0
      %s321 = scalar_select %p320, %s23, 0
      %s322 = sadd.s32 %s321, %s319
      %s323 = smul.addr %s322, 8
      %s324 = scalar_lea.vmem %s1, %s323
      %p325 = scmp.lt.s32.totalorder %s22, 1
      %s326 = scalar_select %p325, %s22, 1
      %p327 = scmp.lt.s32.totalorder %s23, 0
      %s328 = scalar_select %p327, %s23, 0
      %s329 = sadd.s32 %s328, %s326
      %s330 = smul.addr %s329, 8
      %s331 = scalar_lea.vmem %s6, %s330
      %v333 = vld [vmem:[%s316] sm:$0xff]
      %v334 = vld [vmem:[%s316 + $0x8] sm:$0xff]
      %v335 = vld [vmem:[%s316 + $0x10] sm:$0xff]
      %v336 = vld [vmem:[%s316 + $0x18] sm:$0xff]
      %v337 = vld [vmem:[%s324] sm:$0xff]
      %v338 = vsub.f32 %v333, %v337
      %v339 = vsub.f32 %v334, %v337
      %v340 = vsub.f32 %v335, %v337
      %v341 = vsub.f32 %v336, %v337
      %v342 = vld [vmem:[%s2] sm:$0xff]
      %v343 = vld [vmem:[%s3] sm:$0x1]
      %v345 = vlaneseq
      %v346 = vshrl.u32 %v345, 7
      %v347 = vsub.s32 0, %v346
      %v348 = vrot.slane %v343, %v347
      %vm350 = vcmask 64512
      %v352 = vsel %vm350, %v338, 0
      %v355 = vsel %vm350, %v339, 0
      %v358 = vsel %vm350, %v340, 0
      %v361 = vsel %vm350, %v341, 0
      %363 = vmatprep.subr.mxu0 0.0
      %364 = vmatpush1.msra.mxu0 0.0
      %365 = vmatprep.subr.mxu0 0.0
      %366 = vmatpush1.msra.mxu0 0.0
      %367 = vmatprep.subr.mxu0 0.0
      %368 = vmatpush1.msra.mxu0 0.0
      %369 = vmatprep.subr.mxu0 0.0
      %370 = vmatpush1.msra.mxu0 0.0
      %371 = vmatprep.subr.mxu0 0.0
      %372 = vmatpush1.msra.mxu0 0.0
      %373 = vmatprep.subr.mxu0 0.0
      %374 = vmatpush1.msra.mxu0 0.0
      %375 = vmatprep.subr.mxu0 0.0
      %376 = vmatpush1.msra.mxu0 0.0
      %377 = vmatprep.subr.mxu0 0.0
      %378 = vmatpush1.msra.mxu0 0.0
      %379 = vmatprep.subr.mxu0 0.0
      %380 = vmatpush1.msra.mxu0 0.0
      %381 = vmatprep.subr.mxu0 0.0
      %382 = vmatpush1.msra.mxu0 0.0
      %383 = vmatprep.subr.mxu0 0.0
      %384 = vmatpush1.msra.mxu0 0.0
      %385 = vmatprep.subr.mxu0 0.0
      %386 = vmatpush1.msra.mxu0 0.0
      %387 = vmatprep.subr.mxu0 0.0
      %388 = vmatpush1.msra.mxu0 0.0
      %389 = vmatprep.subr.mxu0 0.0
      %390 = vmatpush1.msra.mxu0 0.0
      %391 = vmatprep.subr.mxu0 0.0
      %392 = vmatpush1.msra.mxu0 0.0
      %393 = vmatprep.subr.mxu0 0.0
      %394 = vmatpush1.msra.mxu0 %v342
      %395 = vmatprep.subr.mxu0 0.0
      %396 = vmatpush2.msra.mxu0 0.0
      %397 = vmatprep.subr.mxu0 0.0
      %398 = vmatpush2.msra.mxu0 0.0
      %399 = vmatprep.subr.mxu0 0.0
      %400 = vmatpush2.msra.mxu0 0.0
      %401 = vmatprep.subr.mxu0 0.0
      %402 = vmatpush2.msra.mxu0 0.0
      %403 = vmatprep.subr.mxu0 0.0
      %404 = vmatpush2.msra.mxu0 0.0
      %405 = vmatprep.subr.mxu0 0.0
      %406 = vmatpush2.msra.mxu0 0.0
      %407 = vmatprep.subr.mxu0 0.0
      %408 = vmatpush2.msra.mxu0 0.0
      %409 = vmatprep.subr.mxu0 0.0
      %410 = vmatpush2.msra.mxu0 0.0
      %411 = vmatprep.subr.mxu0 0.0
      %412 = vmatpush2.msra.mxu0 0.0
      %413 = vmatprep.subr.mxu0 0.0
      %414 = vmatpush2.msra.mxu0 0.0
      %415 = vmatprep.subr.mxu0 0.0
      %416 = vmatpush2.msra.mxu0 0.0
      %417 = vmatprep.subr.mxu0 0.0
      %418 = vmatpush2.msra.mxu0 0.0
      %419 = vmatprep.subr.mxu0 0.0
      %420 = vmatpush2.msra.mxu0 0.0
      %421 = vmatprep.subr.mxu0 0.0
      %422 = vmatpush2.msra.mxu0 0.0
      %423 = vmatprep.subr.mxu0 0.0
      %424 = vmatpush2.msra.mxu0 0.0
      %425 = vmatprep.subr.mxu0 0.0
      %426 = vmatpush2.msra.mxu0 0.0
      %427 = vmatprep.mubr.f32.mxu0 0.0
      %428 = vmatmul.mubr.f32.gmra.mxu0 %v352
      %v429 = vpop.f32.mrf.mxu0
      %v430 = vadd.f32 %v348, %v429
      %v431 = vpop.f32.mrf.mxu0
      %432 = vmatprep.mubr.f32.mxu0 0.0
      %433 = vmatmul.mubr.f32.gmra.mxu0 %v355
      %v434 = vpop.f32.mrf.mxu0
      %v435 = vadd.f32 %v348, %v434
      %v436 = vpop.f32.mrf.mxu0
      %437 = vmatprep.mubr.f32.mxu0 0.0
      %438 = vmatmul.mubr.f32.gmra.mxu0 %v358
      %v439 = vpop.f32.mrf.mxu0
      %v440 = vadd.f32 %v348, %v439
      %v441 = vpop.f32.mrf.mxu0
      %442 = vmatprep.mubr.f32.mxu0 0.0
      %443 = vmatmul.mubr.f32.gmra.mxu0 %v361
      %v444 = vpop.f32.mrf.mxu0
      %v445 = vadd.f32 %v348, %v444
      %v446 = vpop.f32.mrf.mxu0
      %447 = vdwg.mxu0
      %v448 = vmax.f32 %v430, 0.0
      %v449 = vmax.f32 %v435, 0.0
      %v450 = vmax.f32 %v440, 0.0
      %v451 = vmax.f32 %v445, 0.0
      %v452 = vld [vmem:[%s4] sm:$0xf]
      %v453 = vld [vmem:[%s4 + $0x4] sm:$0xf]
      %v454 = vld [vmem:[%s4 + $0x8] sm:$0xf]
      %v455 = vld [vmem:[%s4 + $0xc] sm:$0xf]
      %v456 = vld [vmem:[%s4 + $0x10] sm:$0xf]
      %v457 = vld [vmem:[%s4 + $0x14] sm:$0xf]
      %v458 = vld [vmem:[%s4 + $0x18] sm:$0xf]
      %v459 = vld [vmem:[%s4 + $0x1c] sm:$0xf]
      %v460 = vld [vmem:[%s4 + $0x20] sm:$0xf]
      %v461 = vld [vmem:[%s4 + $0x24] sm:$0xf]
      %v462 = vld [vmem:[%s4 + $0x28] sm:$0xf]
      %v463 = vld [vmem:[%s4 + $0x2c] sm:$0xf]
      %v464 = vld [vmem:[%s4 + $0x30] sm:$0xf]
      %v465 = vld [vmem:[%s4 + $0x34] sm:$0xf]
      %v466 = vld [vmem:[%s4 + $0x38] sm:$0xf]
      %v467 = vld [vmem:[%s4 + $0x3c] sm:$0xf]
      %v468 = vld [vmem:[%s5] sm:$0x1]
      %v469 = vpack.c.bf16 %v449, %v448
      %v470 = vpack.c.bf16 %v451, %v450
      %v472 = vlaneseq
      %v473 = vshrl.u32 %v472, 7
      %v474 = vsub.s32 0, %v473
      %v475 = vrot.slane %v468, %v474
      %v493 = vunpack.c.l.b16 %v452
      %v494 = vunpack.c.l.b16 %v453
      %v495 = vunpack.c.l.b16 %v454
      %v496 = vunpack.c.l.b16 %v455
      %v497 = vunpack.c.l.b16 %v456
      %v498 = vunpack.c.l.b16 %v457
      %v499 = vunpack.c.l.b16 %v458
      %v500 = vunpack.c.l.b16 %v459
      %v501 = vunpack.c.l.b16 %v460
      %v502 = vunpack.c.l.b16 %v461
      %v503 = vunpack.c.l.b16 %v462
      %v504 = vunpack.c.l.b16 %v463
      %v505 = vunpack.c.l.b16 %v464
      %v506 = vunpack.c.l.b16 %v465
      %v507 = vunpack.c.l.b16 %v466
      %v508 = vunpack.c.l.b16 %v467
      %v509 = vpack.c.b16 %v494, %v493
      %v510 = vpack.c.b16 %v496, %v495
      %v511 = vpack.c.b16 %v498, %v497
      %v512 = vpack.c.b16 %v500, %v499
      %v513 = vpack.c.b16 %v502, %v501
      %v514 = vpack.c.b16 %v504, %v503
      %v515 = vpack.c.b16 %v506, %v505
      %v516 = vpack.c.b16 %v508, %v507
      %525 = vmatprep.subr.bf16.mxu0 0
      %526 = vmatpush1.bf16.msra.mxu0 %v516
      %527 = vmatprep.subr.bf16.mxu0 0
      %528 = vmatpush1.bf16.msra.mxu0 %v515
      %529 = vmatprep.subr.bf16.mxu0 0
      %530 = vmatpush1.bf16.msra.mxu0 %v514
      %531 = vmatprep.subr.bf16.mxu0 0
      %532 = vmatpush1.bf16.msra.mxu0 %v513
      %533 = vmatprep.subr.bf16.mxu0 0
      %534 = vmatpush1.bf16.msra.mxu0 %v512
      %535 = vmatprep.subr.bf16.mxu0 0
      %536 = vmatpush1.bf16.msra.mxu0 %v511
      %537 = vmatprep.subr.bf16.mxu0 0
      %538 = vmatpush1.bf16.msra.mxu0 %v510
      %539 = vmatprep.subr.bf16.mxu0 0
      %540 = vmatpush1.bf16.msra.mxu0 %v509
      %541 = vmatprep.subr.bf16.mxu0 0
      %542 = vmatpush2.bf16.msra.mxu0 0
      %543 = vmatprep.subr.bf16.mxu0 0
      %544 = vmatpush2.bf16.msra.mxu0 0
      %545 = vmatprep.subr.bf16.mxu0 0
      %546 = vmatpush2.bf16.msra.mxu0 0
      %547 = vmatprep.subr.bf16.mxu0 0
      %548 = vmatpush2.bf16.msra.mxu0 0
      %549 = vmatprep.subr.bf16.mxu0 0
      %550 = vmatpush2.bf16.msra.mxu0 0
      %551 = vmatprep.subr.bf16.mxu0 0
      %552 = vmatpush2.bf16.msra.mxu0 0
      %553 = vmatprep.subr.bf16.mxu0 0
      %554 = vmatpush2.bf16.msra.mxu0 0
      %555 = vmatprep.subr.bf16.mxu0 0
      %556 = vmatpush2.bf16.msra.mxu0 0
      %557 = vmatprep.mubr.bf16.mxu0 0
      %558 = vmatmul.mubr.bf16.gmra.mxu0 %v469
      %v559 = vpop.f32.mrf.mxu0
      %v560 = vadd.f32 %v475, %v559
      %v561 = vpop.f32.mrf.mxu0
      %v562 = vpop.f32.mrf.mxu0
      %v563 = vadd.f32 %v475, %v562
      %v564 = vpop.f32.mrf.mxu0
      %565 = vmatprep.mubr.bf16.mxu0 0
      %566 = vmatmul.mubr.bf16.gmra.mxu0 %v470
      %v567 = vpop.f32.mrf.mxu0
      %v568 = vadd.f32 %v475, %v567
      %v569 = vpop.f32.mrf.mxu0
      %v570 = vpop.f32.mrf.mxu0
      %v571 = vadd.f32 %v475, %v570
      %v572 = vpop.f32.mrf.mxu0
      %573 = vdwg.mxu0
      %v574 = vmax.f32 %v560, 0.0
      %v575 = vmax.f32 %v563, 0.0
      %v576 = vmax.f32 %v568, 0.0
      %v577 = vmax.f32 %v571, 0.0
      %v578 = vmax.f32 %v574, %v575
      %v579 = vmax.f32 %v578, %v576
      %v580 = vmax.f32 %v579, %v577
      %p581 = scmp.eq.s32.totalorder %s24, 0
      // Predicated region
      $region45: #{pointnet_sa_msg_forward.2} parent=43 // pred_check
        %p582 = pneg %p581
      $region46: #{pointnet_sa_msg_forward.2} parent=43 // pred_check_branch
        %584 = sbr.rel (%p582) target = $region48
      $region47: #{pointnet_sa_msg_forward.2} parent=43 // pred_region
        %585 = vst [vmem:[%s331] sm:$0xff] %v580
      $region48: #{pointnet_sa_msg_forward.2} parent=43 // pred_fallthru
        _
      %p586 = scmp.gt.s32.totalorder %s24, 0
      // Predicated region
      $region49: #{pointnet_sa_msg_forward.2} parent=43 // pred_check
        %p587 = pneg %p586
      $region50: #{pointnet_sa_msg_forward.2} parent=43 // pred_check_branch
        %589 = sbr.rel (%p587) target = $region52
      $region51: #{pointnet_sa_msg_forward.2} parent=43 // pred_region
        %v590 = vld [vmem:[%s331] sm:$0xff]
        %v591 = vmax.f32 %v590, %v580
        %592 = vst [vmem:[%s331] sm:$0xff] %v591
      $region52: #{pointnet_sa_msg_forward.2} parent=43 // pred_fallthru
        _
      %p593 = scmp.lt.s32.totalorder %s22, 1
      %s594 = scalar_select %p593, %s22, 1
      %p595 = scmp.lt.s32.totalorder %s23, 0
      %s596 = scalar_select %p595, %s23, 0
      %s597 = sadd.s32 %s596, %s594
      %s598 = smul.addr %s597, 8
      %s599 = scalar_lea.vmem %s6, %s598
      // Predicated region
      $region53: #{pointnet_sa_msg_forward.2} parent=43 // pred_check
        %p600 = pneg %p198
      $region54: #{pointnet_sa_msg_forward.2} parent=43 // pred_check_branch
        %602 = sbr.rel (%p600) target = $region56
      $region55: #{pointnet_sa_msg_forward.2} parent=43 // pred_region
        _
      $region56: #{pointnet_sa_msg_forward.2} parent=43 // pred_fallthru
        _
    $region44: #{pointnet_sa_msg_forward.2} parent=5 // pred_fallthru
      _
    %p603 = scmp.le.s32.totalorder 2, %s12
    // Predicated region
    $region57: #{pointnet_sa_msg_forward.2} parent=5 // pred_check
      %p604 = pneg %p603
    $region58: #{pointnet_sa_msg_forward.2} parent=5 // pred_check_branch
      %606 = sbr.rel (%p604) target = $region60
    $region59: #{pointnet_sa_msg_forward.2} parent=5 // pred_region
      %s607 = ssub.s32 %s12, 2
      // Predicated region
      $region61: #{pointnet_sa_msg_forward.2} parent=59 // pred_check
        %p608 = pneg %p204
      $region62: #{pointnet_sa_msg_forward.2} parent=59 // pred_check_branch
        %610 = sbr.rel (%p608) target = $region64
      $region63: #{pointnet_sa_msg_forward.2} parent=59 // pred_region
        %p611 = scmp.lt.s32.totalorder %s25, 1
        %s612 = scalar_select %p611, %s25, 1
        %p613 = scmp.lt.s32.totalorder %s26, 0
        %s614 = scalar_select %p613, %s26, 0
        %s615 = sadd.s32 %s614, %s612
        %s616 = smul.addr %s615, 8
        %s617 = scalar_lea.vmem %s6, %s616
      $region64: #{pointnet_sa_msg_forward.2} parent=59 // pred_fallthru
        _
    $region60: #{pointnet_sa_msg_forward.2} parent=5 // pred_fallthru
      _
  $region6: #{pointnet_sa_msg_forward.2} parent=0 // loop_footer
    %s16 = sadd.s32 1, %s12
  $region7: #{pointnet_sa_msg_forward.2} parent=0 // loop_footer_branch
    %11 = sbr.rel target = $region3
  $region8: #{pointnet_sa_msg_forward.2} parent=0 // loop_exit
    _

// kernel: pointnet_sa_msg_forward.3
$region0: #{pointnet_sa_msg_forward.3}
  #allocation0 [shape = 'u32[]', space=smem, size = 0x4, offset = 0x4, fixed_abs, tag = 'smem constant byte address 0x4 - core index']
  #allocation1 [shape = 'u32[144,128]{1,0:T(1,128)}', space=vmem, size = 0x12000, scoped, tag = 'internal scratch']
  %s0 = inlined_call_operand.vmem [shape: f32[2,8,8,8], index: 0, kind: input, shape index: {}]
  %s1 = inlined_call_operand.vmem [shape: f32[2,8,8], index: 1, kind: input, shape index: {}]
  %s2 = inlined_call_operand.vmem [shape: f32[8,128], index: 2, kind: input, shape index: {}]
  %s3 = inlined_call_operand.vmem [shape: f32[1,128], index: 3, kind: input, shape index: {}]
  %s4 = inlined_call_operand.vmem [shape: bf16[128,128], index: 4, kind: input, shape index: {}]
  %s5 = inlined_call_operand.vmem [shape: f32[1,128], index: 5, kind: input, shape index: {}]
  %s6 = inlined_call_operand.vmem [shape: f32[2,8,128], index: 6, kind: output, shape index: {}]
  %s7 = sld [smem:[#allocation0]]
  $region65: #{pointnet_sa_msg_forward.3} parent=0
    _
  %s9 = ssub.s32 1, %s7
  %s10 = scalar_select 0, %s9, %s7
  loop: start=0, step=1, limit=4
  $region2: #{pointnet_sa_msg_forward.3} parent=0 // loop_pre_header
    _
  $region3: #{pointnet_sa_msg_forward.3} parent=0 // loop_header
    %s12 = sphi 0, %s16
    %p13 = scmp.ge.s32.totalorder %s12, 4
    %s19 = sphi 0, %s38
    %s20 = sphi 0, %s34
    %s21 = sphi 0, %s30
    %s22 = sphi 0, %s19
    %s23 = sphi 0, %s20
    %s24 = sphi 0, %s21
    %s25 = sphi 0, %s22
    %s26 = sphi 0, %s23
    %s27 = sphi 0, %s24
    %s45 = sphi 0, %s47
    %s48 = sphi 0, %s45
    %s49 = sphi 0, %s48
    %s65 = sphi 0, %s49
    %s73 = sphi 0, %s75
    %s76 = sphi 0, %s73
    %s77 = sphi 0, %s76
    %s93 = sphi 0, %s77
    %s97 = sphi 0, %s97
    %s99 = sphi 0, %s97
    %s100 = sphi 0, %s99
    %s114 = sphi 0, %s100
    %s118 = sphi 0, %s118
    %s120 = sphi 0, %s118
    %s121 = sphi 0, %s120
    %s135 = sphi 0, %s121
    %s139 = sphi 0, %s139
    %s141 = sphi 0, %s139
    %s142 = sphi 0, %s141
    %s156 = sphi 0, %s142
    %s160 = sphi 0, %s160
    %s162 = sphi 0, %s160
    %s163 = sphi 0, %s162
    %s177 = sphi 0, %s163
    %s185 = sphi 0, %s187
    %s188 = sphi 0, %s185
    %s189 = sphi 0, %s188
    %s205 = sphi 0, %s189
  $region4: #{pointnet_sa_msg_forward.3} parent=0 // loop_header_branch
    %15 = sbr.rel (%p13) target = $region8
  $region5: #{pointnet_sa_msg_forward.3} parent=0 // loop_body
    %s17 = ssub.s32 %s12, 1
    %s18 = ssub.s32 %s12, 2
    %s28 = sadd.s32 1, %s21
    %p29 = scmp.ge.s32.totalorder %s28, 1
    %s30 = scalar_select %p29, 0, %s28
    %s31 = sadd.s32 1, %s20
    %s32 = scalar_select %p29, %s31, %s20
    %p33 = scmp.ge.s32.totalorder %s32, 1
    %s34 = scalar_select %p33, 0, %s32
    %s35 = sadd.s32 1, %s19
    %s36 = scalar_select %p33, %s35, %s19
    %p37 = scmp.ge.s32.totalorder %s36, 2
    %s38 = scalar_select %p37, 0, %s36
    %s39 = ssub.s32 %s19, %s38
    %s40 = ssub.s32 %s21, %s30
    %s41 = sor.u32 %s39, %s40
    %s42 = ssub.s32 %s20, %s34
    %s43 = sor.u32 %s41, %s42
    %p44 = scmp.eq.s32.totalorder %s43, 0
    %s46 = sadd.s32 %s45, 1
    %s47 = scalar_select %p44, %s45, %s46
    %p50 = pneg %p44
    %p51 = scmp.eq.s32.totalorder %s12, 1
    %p52 = por %p50, %p51
    %p53 = scmp.ne.s32.totalorder %s45, %s48
    %p54 = scmp.eq.s32.totalorder %s12, 0
    %p55 = por %p53, %p54
    %p56 = scmp.ne.s32.totalorder %s45, %s48
    %p57 = scmp.eq.s32.totalorder %s17, 1
    %p58 = por %p56, %p57
    %p59 = scmp.ne.s32.totalorder %s48, %s49
    %p60 = scmp.eq.s32.totalorder %s17, 0
    %p61 = por %p59, %p60
    %p62 = scmp.ne.s32.totalorder %s48, %s49
    %p63 = scmp.eq.s32.totalorder %s18, 1
    %p64 = por %p62, %p63
    %p66 = scmp.ne.s32.totalorder %s49, %s65
    %p67 = scmp.eq.s32.totalorder %s18, 0
    %p68 = por %p66, %p67
    %s69 = ssub.s32 %s19, %s38
    %s70 = ssub.s32 %s20, %s34
    %s71 = sor.u32 %s69, %s70
    %p72 = scmp.eq.s32.totalorder %s71, 0
    %s74 = sadd.s32 %s73, 1
    %s75 = scalar_select %p72, %s73, %s74
    %p78 = pneg %p72
    %p79 = scmp.eq.s32.totalorder %s12, 1
    %p80 = por %p78, %p79
    %p81 = scmp.ne.s32.totalorder %s73, %s76
    %p82 = scmp.eq.s32.totalorder %s12, 0
    %p83 = por %p81, %p82
    %p84 = scmp.ne.s32.totalorder %s73, %s76
    %p85 = scmp.eq.s32.totalorder %s17, 1
    %p86 = por %p84, %p85
    %p87 = scmp.ne.s32.totalorder %s76, %s77
    %p88 = scmp.eq.s32.totalorder %s17, 0
    %p89 = por %p87, %p88
    %p90 = scmp.ne.s32.totalorder %s76, %s77
    %p91 = scmp.eq.s32.totalorder %s18, 1
    %p92 = por %p90, %p91
    %p94 = scmp.ne.s32.totalorder %s77, %s93
    %p95 = scmp.eq.s32.totalorder %s18, 0
    %p96 = por %p94, %p95
    %s98 = sadd.s32 %s97, 1
    %p101 = scmp.eq.s32.totalorder %s12, 1
    %p102 = scmp.ne.s32.totalorder %s97, %s99
    %p103 = scmp.eq.s32.totalorder %s12, 0
    %p104 = por %p102, %p103
    %p105 = scmp.ne.s32.totalorder %s97, %s99
    %p106 = scmp.eq.s32.totalorder %s17, 1
    %p107 = por %p105, %p106
    %p108 = scmp.ne.s32.totalorder %s99, %s100
    %p109 = scmp.eq.s32.totalorder %s17, 0
    %p110 = por %p108, %p109
    %p111 = scmp.ne.s32.totalorder %s99, %s100
    %p112 = scmp.eq.s32.totalorder %s18, 1
    %p113 = por %p111, %p112
    %p115 = scmp.ne.s32.totalorder %s100, %s114
    %p116 = scmp.eq.s32.totalorder %s18, 0
    %p117 = por %p115, %p116
    %s119 = sadd.s32 %s118, 1
    %p122 = scmp.eq.s32.totalorder %s12, 1
    %p123 = scmp.ne.s32.totalorder %s118, %s120
    %p124 = scmp.eq.s32.totalorder %s12, 0
    %p125 = por %p123, %p124
    %p126 = scmp.ne.s32.totalorder %s118, %s120
    %p127 = scmp.eq.s32.totalorder %s17, 1
    %p128 = por %p126, %p127
    %p129 = scmp.ne.s32.totalorder %s120, %s121
    %p130 = scmp.eq.s32.totalorder %s17, 0
    %p131 = por %p129, %p130
    %p132 = scmp.ne.s32.totalorder %s120, %s121
    %p133 = scmp.eq.s32.totalorder %s18, 1
    %p134 = por %p132, %p133
    %p136 = scmp.ne.s32.totalorder %s121, %s135
    %p137 = scmp.eq.s32.totalorder %s18, 0
    %p138 = por %p136, %p137
    %s140 = sadd.s32 %s139, 1
    %p143 = scmp.eq.s32.totalorder %s12, 1
    %p144 = scmp.ne.s32.totalorder %s139, %s141
    %p145 = scmp.eq.s32.totalorder %s12, 0
    %p146 = por %p144, %p145
    %p147 = scmp.ne.s32.totalorder %s139, %s141
    %p148 = scmp.eq.s32.totalorder %s17, 1
    %p149 = por %p147, %p148
    %p150 = scmp.ne.s32.totalorder %s141, %s142
    %p151 = scmp.eq.s32.totalorder %s17, 0
    %p152 = por %p150, %p151
    %p153 = scmp.ne.s32.totalorder %s141, %s142
    %p154 = scmp.eq.s32.totalorder %s18, 1
    %p155 = por %p153, %p154
    %p157 = scmp.ne.s32.totalorder %s142, %s156
    %p158 = scmp.eq.s32.totalorder %s18, 0
    %p159 = por %p157, %p158
    %s161 = sadd.s32 %s160, 1
    %p164 = scmp.eq.s32.totalorder %s12, 1
    %p165 = scmp.ne.s32.totalorder %s160, %s162
    %p166 = scmp.eq.s32.totalorder %s12, 0
    %p167 = por %p165, %p166
    %p168 = scmp.ne.s32.totalorder %s160, %s162
    %p169 = scmp.eq.s32.totalorder %s17, 1
    %p170 = por %p168, %p169
    %p171 = scmp.ne.s32.totalorder %s162, %s163
    %p172 = scmp.eq.s32.totalorder %s17, 0
    %p173 = por %p171, %p172
    %p174 = scmp.ne.s32.totalorder %s162, %s163
    %p175 = scmp.eq.s32.totalorder %s18, 1
    %p176 = por %p174, %p175
    %p178 = scmp.ne.s32.totalorder %s163, %s177
    %p179 = scmp.eq.s32.totalorder %s18, 0
    %p180 = por %p178, %p179
    %s181 = ssub.s32 %s19, %s38
    %s182 = ssub.s32 %s20, %s34
    %s183 = sor.u32 %s181, %s182
    %p184 = scmp.eq.s32.totalorder %s183, 0
    %s186 = sadd.s32 %s185, 1
    %s187 = scalar_select %p184, %s185, %s186
    %p190 = pneg %p184
    %p191 = scmp.eq.s32.totalorder %s12, 1
    %p192 = por %p190, %p191
    %p193 = scmp.ne.s32.totalorder %s185, %s188
    %p194 = scmp.eq.s32.totalorder %s12, 0
    %p195 = por %p193, %p194
    %p196 = scmp.ne.s32.totalorder %s185, %s188
    %p197 = scmp.eq.s32.totalorder %s17, 1
    %p198 = por %p196, %p197
    %p199 = scmp.ne.s32.totalorder %s188, %s189
    %p200 = scmp.eq.s32.totalorder %s17, 0
    %p201 = por %p199, %p200
    %p202 = scmp.ne.s32.totalorder %s188, %s189
    %p203 = scmp.eq.s32.totalorder %s18, 1
    %p204 = por %p202, %p203
    %p206 = scmp.ne.s32.totalorder %s189, %s205
    %p207 = scmp.eq.s32.totalorder %s18, 0
    %p208 = por %p206, %p207
    %p209 = scmp.le.s32.totalorder 1, %s12
    %p210 = scmp.lt.s32.totalorder %s12, 3
    %p211 = pnand %p209, %p210
    %p212 = pneg %p211
    // Predicated region
    $region9: #{pointnet_sa_msg_forward.3} parent=5 // pred_check
      _
    $region10: #{pointnet_sa_msg_forward.3} parent=5 // pred_check_branch
      %214 = sbr.rel (%p211) target = $region12
    $region11: #{pointnet_sa_msg_forward.3} parent=5 // pred_region
      %s215 = ssub.s32 %s12, 1
      // Predicated region
      $region13: #{pointnet_sa_msg_forward.3} parent=11 // pred_check
        %p216 = pneg %p110
      $region14: #{pointnet_sa_msg_forward.3} parent=11 // pred_check_branch
        %218 = sbr.rel (%p216) target = $region16
      $region15: #{pointnet_sa_msg_forward.3} parent=11 // pred_region
        _
      $region16: #{pointnet_sa_msg_forward.3} parent=11 // pred_fallthru
        _
      // Predicated region
      $region17: #{pointnet_sa_msg_forward.3} parent=11 // pred_check
        %p219 = pneg %p131
      $region18: #{pointnet_sa_msg_forward.3} parent=11 // pred_check_branch
        %221 = sbr.rel (%p219) target = $region20
      $region19: #{pointnet_sa_msg_forward.3} parent=11 // pred_region
        _
      $region20: #{pointnet_sa_msg_forward.3} parent=11 // pred_fallthru
        _
      // Predicated region
      $region21: #{pointnet_sa_msg_forward.3} parent=11 // pred_check
        %p222 = pneg %p152
      $region22: #{pointnet_sa_msg_forward.3} parent=11 // pred_check_branch
        %224 = sbr.rel (%p222) target = $region24
      $region23: #{pointnet_sa_msg_forward.3} parent=11 // pred_region
        _
      $region24: #{pointnet_sa_msg_forward.3} parent=11 // pred_fallthru
        _
      // Predicated region
      $region25: #{pointnet_sa_msg_forward.3} parent=11 // pred_check
        %p225 = pneg %p173
      $region26: #{pointnet_sa_msg_forward.3} parent=11 // pred_check_branch
        %227 = sbr.rel (%p225) target = $region28
      $region27: #{pointnet_sa_msg_forward.3} parent=11 // pred_region
        _
      $region28: #{pointnet_sa_msg_forward.3} parent=11 // pred_fallthru
        _
    $region12: #{pointnet_sa_msg_forward.3} parent=5 // pred_fallthru
      _
    %p228 = scmp.lt.s32.totalorder %s12, 2
    // Predicated region
    $region29: #{pointnet_sa_msg_forward.3} parent=5 // pred_check
      %p229 = pneg %p228
    $region30: #{pointnet_sa_msg_forward.3} parent=5 // pred_check_branch
      %231 = sbr.rel (%p229) target = $region32
    $region31: #{pointnet_sa_msg_forward.3} parent=5 // pred_region
      // Predicated region
      $region33: #{pointnet_sa_msg_forward.3} parent=31 // pred_check
        %p232 = pneg %p55
      $region34: #{pointnet_sa_msg_forward.3} parent=31 // pred_check_branch
        %234 = sbr.rel (%p232) target = $region36
      $region35: #{pointnet_sa_msg_forward.3} parent=31 // pred_region
        %s235 = smul.u32 8, %s21
        %p236 = scmp.lt.s32.totalorder %s19, 1
        %s237 = scalar_select %p236, %s19, 1
        %p238 = scmp.lt.s32.totalorder %s235, 7
        %s239 = scalar_select %p238, %s235, 7
        %p240 = scmp.lt.s32.totalorder %s20, 0
        %s241 = scalar_select %p240, %s20, 0
        %s242 = sadd.s32 %s241, %s239
        %s243 = smul.addr %s237, 8
        %s244 = sadd.s32 %s242, %s243
        %s245 = smul.addr %s244, 8
        %s246 = scalar_lea.vmem %s0, %s245
        %s247 = smul.u32 8, %s21
      $region36: #{pointnet_sa_msg_forward.3} parent=31 // pred_fallthru
        _
      // Predicated region
      $region37: #{pointnet_sa_msg_forward.3} parent=31 // pred_check
        %p248 = pneg %p83
      $region38: #{pointnet_sa_msg_forward.3} parent=31 // pred_check_branch
        %250 = sbr.rel (%p248) target = $region40
      $region39: #{pointnet_sa_msg_forward.3} parent=31 // pred_region
        %p251 = scmp.lt.s32.totalorder %s19, 1
        %s252 = scalar_select %p251, %s19, 1
        %p253 = scmp.lt.s32.totalorder %s20, 0
        %s254 = scalar_select %p253, %s20, 0
        %s255 = sadd.s32 %s254, %s252
        %s256 = smul.addr %s255, 8
        %s257 = scalar_lea.vmem %s1, %s256
      $region40: #{pointnet_sa_msg_forward.3} parent=31 // pred_fallthru
        _
    $region32: #{pointnet_sa_msg_forward.3} parent=5 // pred_fallthru
      _
    %p258 = scmp.le.s32.totalorder 1, %s12
    %p259 = scmp.lt.s32.totalorder %s12, 3
    %p260 = pnand %p258, %p259
    %p261 = pneg %p260
    // Predicated region
    $region41: #{pointnet_sa_msg_forward.3} parent=5 // pred_check
      _
    $region42: #{pointnet_sa_msg_forward.3} parent=5 // pred_check_branch
      %263 = sbr.rel (%p260) target = $region44
    $region43: #{pointnet_sa_msg_forward.3} parent=5 // pred_region
      %s264 = ssub.s32 %s12, 1
      %s265 = smul.u32 8, %s24
      %p266 = scmp.lt.s32.totalorder %s22, 1
      %s267 = scalar_select %p266, %s22, 1
      %p268 = scmp.lt.s32.totalorder %s265, 7
      %s269 = scalar_select %p268, %s265, 7
      %p270 = scmp.lt.s32.totalorder %s23, 0
      %s271 = scalar_select %p270, %s23, 0
      %s272 = sadd.s32 %s271, %s269
      %s273 = smul.addr %s267, 8
      %s274 = sadd.s32 %s272, %s273
      %s275 = smul.addr %s274, 8
      %s276 = scalar_lea.vmem %s0, %s275
      %p277 = pneg %p61
      %p278 = pneg %p58
      %p279 = scmp.lt.s32.totalorder %s22, 1
      %s280 = scalar_select %p279, %s22, 1
      %p281 = scmp.lt.s32.totalorder %s23, 0
      %s282 = scalar_select %p281, %s23, 0
      %s283 = sadd.s32 %s282, %s280
      %s284 = smul.addr %s283, 8
      %s285 = scalar_lea.vmem %s1, %s284
      %p286 = pneg %p89
      %p287 = pneg %p86
      %p288 = pneg %p110
      %p289 = pneg %p107
      %p290 = pneg %p131
      %p291 = pneg %p128
      %p292 = pneg %p152
      %p293 = pneg %p149
      %p294 = pneg %p173
      %p295 = pneg %p170
      %p296 = pneg %p201
      %p297 = pneg %p198
      %p298 = scmp.lt.s32.totalorder %s22, 1
      %s299 = scalar_select %p298, %s22, 1
      %p300 = scmp.lt.s32.totalorder %s23, 0
      %s301 = scalar_select %p300, %s23, 0
      %s302 = sadd.s32 %s301, %s299
      %s303 = smul.addr %s302, 8
      %s304 = scalar_lea.vmem %s6, %s303
      %s305 = smul.u32 8, %s24
      %p306 = scmp.lt.s32.totalorder %s22, 1
      %s307 = scalar_select %p306, %s22, 1
      %p308 = scmp.lt.s32.totalorder %s305, 7
      %s309 = scalar_select %p308, %s305, 7
      %p310 = scmp.lt.s32.totalorder %s23, 0
      %s311 = scalar_select %p310, %s23, 0
      %s312 = sadd.s32 %s311, %s309
      %s313 = smul.addr %s307, 8
      %s314 = sadd.s32 %s312, %s313
      %s315 = smul.addr %s314, 8
      %s316 = scalar_lea.vmem %s0, %s315
      %s317 = smul.u32 8, %s24
      %p318 = scmp.lt.s32.totalorder %s22, 1
      %s319 = scalar_select %p318, %s22, 1
      %p320 = scmp.lt.s32.totalorder %s23, 0
      %s321 = scalar_select %p320, %s23, 0
      %s322 = sadd.s32 %s321, %s319
      %s323 = smul.addr %s322, 8
      %s324 = scalar_lea.vmem %s1, %s323
      %p325 = scmp.lt.s32.totalorder %s22, 1
      %s326 = scalar_select %p325, %s22, 1
      %p327 = scmp.lt.s32.totalorder %s23, 0
      %s328 = scalar_select %p327, %s23, 0
      %s329 = sadd.s32 %s328, %s326
      %s330 = smul.addr %s329, 8
      %s331 = scalar_lea.vmem %s6, %s330
      %v333 = vld [vmem:[%s316] sm:$0xff]
      %v334 = vld [vmem:[%s316 + $0x8] sm:$0xff]
      %v335 = vld [vmem:[%s316 + $0x10] sm:$0xff]
      %v336 = vld [vmem:[%s316 + $0x18] sm:$0xff]
      %v337 = vld [vmem:[%s316 + $0x20] sm:$0xff]
      %v338 = vld [vmem:[%s316 + $0x28] sm:$0xff]
      %v339 = vld [vmem:[%s316 + $0x30] sm:$0xff]
      %v340 = vld [vmem:[%s316 + $0x38] sm:$0xff]
      %v341 = vld [vmem:[%s324] sm:$0xff]
      %v342 = vsub.f32 %v333, %v341
      %v343 = vsub.f32 %v334, %v341
      %v344 = vsub.f32 %v335, %v341
      %v345 = vsub.f32 %v336, %v341
      %v346 = vsub.f32 %v337, %v341
      %v347 = vsub.f32 %v338, %v341
      %v348 = vsub.f32 %v339, %v341
      %v349 = vsub.f32 %v340, %v341
      %v350 = vld [vmem:[%s2] sm:$0xff]
      %v351 = vld [vmem:[%s3] sm:$0x1]
      %v353 = vlaneseq
      %v354 = vshrl.u32 %v353, 7
      %v355 = vsub.s32 0, %v354
      %v356 = vrot.slane %v351, %v355
      %vm358 = vcmask 64512
      %v360 = vsel %vm358, %v342, 0
      %v363 = vsel %vm358, %v343, 0
      %v366 = vsel %vm358, %v344, 0
      %v369 = vsel %vm358, %v345, 0
      %v372 = vsel %vm358, %v346, 0
      %v375 = vsel %vm358, %v347, 0
      %v378 = vsel %vm358, %v348, 0
      %v381 = vsel %vm358, %v349, 0
      %383 = vmatprep.subr.mxu0 0.0
      %384 = vmatpush1.msra.mxu0 0.0
      %385 = vmatprep.subr.mxu0 0.0
      %386 = vmatpush1.msra.mxu0 0.0
      %387 = vmatprep.subr.mxu0 0.0
      %388 = vmatpush1.msra.mxu0 0.0
      %389 = vmatprep.subr.mxu0 0.0
      %390 = vmatpush1.msra.mxu0 0.0
      %391 = vmatprep.subr.mxu0 0.0
      %392 = vmatpush1.msra.mxu0 0.0
      %393 = vmatprep.subr.mxu0 0.0
      %394 = vmatpush1.msra.mxu0 0.0
      %395 = vmatprep.subr.mxu0 0.0
      %396 = vmatpush1.msra.mxu0 0.0
      %397 = vmatprep.subr.mxu0 0.0
      %398 = vmatpush1.msra.mxu0 0.0
      %399 = vmatprep.subr.mxu0 0.0
      %400 = vmatpush1.msra.mxu0 0.0
      %401 = vmatprep.subr.mxu0 0.0
      %402 = vmatpush1.msra.mxu0 0.0
      %403 = vmatprep.subr.mxu0 0.0
      %404 = vmatpush1.msra.mxu0 0.0
      %405 = vmatprep.subr.mxu0 0.0
      %406 = vmatpush1.msra.mxu0 0.0
      %407 = vmatprep.subr.mxu0 0.0
      %408 = vmatpush1.msra.mxu0 0.0
      %409 = vmatprep.subr.mxu0 0.0
      %410 = vmatpush1.msra.mxu0 0.0
      %411 = vmatprep.subr.mxu0 0.0
      %412 = vmatpush1.msra.mxu0 0.0
      %413 = vmatprep.subr.mxu0 0.0
      %414 = vmatpush1.msra.mxu0 %v350
      %415 = vmatprep.subr.mxu0 0.0
      %416 = vmatpush2.msra.mxu0 0.0
      %417 = vmatprep.subr.mxu0 0.0
      %418 = vmatpush2.msra.mxu0 0.0
      %419 = vmatprep.subr.mxu0 0.0
      %420 = vmatpush2.msra.mxu0 0.0
      %421 = vmatprep.subr.mxu0 0.0
      %422 = vmatpush2.msra.mxu0 0.0
      %423 = vmatprep.subr.mxu0 0.0
      %424 = vmatpush2.msra.mxu0 0.0
      %425 = vmatprep.subr.mxu0 0.0
      %426 = vmatpush2.msra.mxu0 0.0
      %427 = vmatprep.subr.mxu0 0.0
      %428 = vmatpush2.msra.mxu0 0.0
      %429 = vmatprep.subr.mxu0 0.0
      %430 = vmatpush2.msra.mxu0 0.0
      %431 = vmatprep.subr.mxu0 0.0
      %432 = vmatpush2.msra.mxu0 0.0
      %433 = vmatprep.subr.mxu0 0.0
      %434 = vmatpush2.msra.mxu0 0.0
      %435 = vmatprep.subr.mxu0 0.0
      %436 = vmatpush2.msra.mxu0 0.0
      %437 = vmatprep.subr.mxu0 0.0
      %438 = vmatpush2.msra.mxu0 0.0
      %439 = vmatprep.subr.mxu0 0.0
      %440 = vmatpush2.msra.mxu0 0.0
      %441 = vmatprep.subr.mxu0 0.0
      %442 = vmatpush2.msra.mxu0 0.0
      %443 = vmatprep.subr.mxu0 0.0
      %444 = vmatpush2.msra.mxu0 0.0
      %445 = vmatprep.subr.mxu0 0.0
      %446 = vmatpush2.msra.mxu0 0.0
      %447 = vmatprep.mubr.f32.mxu0 0.0
      %448 = vmatmul.mubr.f32.gmra.mxu0 %v360
      %v449 = vpop.f32.mrf.mxu0
      %v450 = vadd.f32 %v356, %v449
      %v451 = vpop.f32.mrf.mxu0
      %452 = vmatprep.mubr.f32.mxu0 0.0
      %453 = vmatmul.mubr.f32.gmra.mxu0 %v363
      %v454 = vpop.f32.mrf.mxu0
      %v455 = vadd.f32 %v356, %v454
      %v456 = vpop.f32.mrf.mxu0
      %457 = vmatprep.mubr.f32.mxu0 0.0
      %458 = vmatmul.mubr.f32.gmra.mxu0 %v366
      %v459 = vpop.f32.mrf.mxu0
      %v460 = vadd.f32 %v356, %v459
      %v461 = vpop.f32.mrf.mxu0
      %462 = vmatprep.mubr.f32.mxu0 0.0
      %463 = vmatmul.mubr.f32.gmra.mxu0 %v369
      %v464 = vpop.f32.mrf.mxu0
      %v465 = vadd.f32 %v356, %v464
      %v466 = vpop.f32.mrf.mxu0
      %467 = vmatprep.mubr.f32.mxu0 0.0
      %468 = vmatmul.mubr.f32.gmra.mxu0 %v372
      %v469 = vpop.f32.mrf.mxu0
      %v470 = vadd.f32 %v356, %v469
      %v471 = vpop.f32.mrf.mxu0
      %472 = vmatprep.mubr.f32.mxu0 0.0
      %473 = vmatmul.mubr.f32.gmra.mxu0 %v375
      %v474 = vpop.f32.mrf.mxu0
      %v475 = vadd.f32 %v356, %v474
      %v476 = vpop.f32.mrf.mxu0
      %477 = vmatprep.mubr.f32.mxu0 0.0
      %478 = vmatmul.mubr.f32.gmra.mxu0 %v378
      %v479 = vpop.f32.mrf.mxu0
      %v480 = vadd.f32 %v356, %v479
      %v481 = vpop.f32.mrf.mxu0
      %482 = vmatprep.mubr.f32.mxu0 0.0
      %483 = vmatmul.mubr.f32.gmra.mxu0 %v381
      %v484 = vpop.f32.mrf.mxu0
      %v485 = vadd.f32 %v356, %v484
      %v486 = vpop.f32.mrf.mxu0
      %487 = vdwg.mxu0
      %v488 = vmax.f32 %v450, 0.0
      %v489 = vmax.f32 %v455, 0.0
      %v490 = vmax.f32 %v460, 0.0
      %v491 = vmax.f32 %v465, 0.0
      %v492 = vmax.f32 %v470, 0.0
      %v493 = vmax.f32 %v475, 0.0
      %v494 = vmax.f32 %v480, 0.0
      %v495 = vmax.f32 %v485, 0.0
      %v496 = vld [vmem:[%s4] sm:$0xf]
      %v497 = vld [vmem:[%s4 + $0x4] sm:$0xf]
      %v498 = vld [vmem:[%s4 + $0x8] sm:$0xf]
      %v499 = vld [vmem:[%s4 + $0xc] sm:$0xf]
      %v500 = vld [vmem:[%s4 + $0x10] sm:$0xf]
      %v501 = vld [vmem:[%s4 + $0x14] sm:$0xf]
      %v502 = vld [vmem:[%s4 + $0x18] sm:$0xf]
      %v503 = vld [vmem:[%s4 + $0x1c] sm:$0xf]
      %v504 = vld [vmem:[%s4 + $0x20] sm:$0xf]
      %v505 = vld [vmem:[%s4 + $0x24] sm:$0xf]
      %v506 = vld [vmem:[%s4 + $0x28] sm:$0xf]
      %v507 = vld [vmem:[%s4 + $0x2c] sm:$0xf]
      %v508 = vld [vmem:[%s4 + $0x30] sm:$0xf]
      %v509 = vld [vmem:[%s4 + $0x34] sm:$0xf]
      %v510 = vld [vmem:[%s4 + $0x38] sm:$0xf]
      %v511 = vld [vmem:[%s4 + $0x3c] sm:$0xf]
      %v512 = vld [vmem:[%s5] sm:$0x1]
      %v513 = vpack.c.bf16 %v489, %v488
      %v514 = vpack.c.bf16 %v491, %v490
      %v515 = vpack.c.bf16 %v493, %v492
      %v516 = vpack.c.bf16 %v495, %v494
      %v518 = vlaneseq
      %v519 = vshrl.u32 %v518, 7
      %v520 = vsub.s32 0, %v519
      %v521 = vrot.slane %v512, %v520
      %v539 = vunpack.c.l.b16 %v496
      %v540 = vunpack.c.l.b16 %v497
      %v541 = vunpack.c.l.b16 %v498
      %v542 = vunpack.c.l.b16 %v499
      %v543 = vunpack.c.l.b16 %v500
      %v544 = vunpack.c.l.b16 %v501
      %v545 = vunpack.c.l.b16 %v502
      %v546 = vunpack.c.l.b16 %v503
      %v547 = vunpack.c.l.b16 %v504
      %v548 = vunpack.c.l.b16 %v505
      %v549 = vunpack.c.l.b16 %v506
      %v550 = vunpack.c.l.b16 %v507
      %v551 = vunpack.c.l.b16 %v508
      %v552 = vunpack.c.l.b16 %v509
      %v553 = vunpack.c.l.b16 %v510
      %v554 = vunpack.c.l.b16 %v511
      %v555 = vpack.c.b16 %v540, %v539
      %v556 = vpack.c.b16 %v542, %v541
      %v557 = vpack.c.b16 %v544, %v543
      %v558 = vpack.c.b16 %v546, %v545
      %v559 = vpack.c.b16 %v548, %v547
      %v560 = vpack.c.b16 %v550, %v549
      %v561 = vpack.c.b16 %v552, %v551
      %v562 = vpack.c.b16 %v554, %v553
      %571 = vmatprep.subr.bf16.mxu0 0
      %572 = vmatpush1.bf16.msra.mxu0 %v562
      %573 = vmatprep.subr.bf16.mxu0 0
      %574 = vmatpush1.bf16.msra.mxu0 %v561
      %575 = vmatprep.subr.bf16.mxu0 0
      %576 = vmatpush1.bf16.msra.mxu0 %v560
      %577 = vmatprep.subr.bf16.mxu0 0
      %578 = vmatpush1.bf16.msra.mxu0 %v559
      %579 = vmatprep.subr.bf16.mxu0 0
      %580 = vmatpush1.bf16.msra.mxu0 %v558
      %581 = vmatprep.subr.bf16.mxu0 0
      %582 = vmatpush1.bf16.msra.mxu0 %v557
      %583 = vmatprep.subr.bf16.mxu0 0
      %584 = vmatpush1.bf16.msra.mxu0 %v556
      %585 = vmatprep.subr.bf16.mxu0 0
      %586 = vmatpush1.bf16.msra.mxu0 %v555
      %587 = vmatprep.subr.bf16.mxu0 0
      %588 = vmatpush2.bf16.msra.mxu0 0
      %589 = vmatprep.subr.bf16.mxu0 0
      %590 = vmatpush2.bf16.msra.mxu0 0
      %591 = vmatprep.subr.bf16.mxu0 0
      %592 = vmatpush2.bf16.msra.mxu0 0
      %593 = vmatprep.subr.bf16.mxu0 0
      %594 = vmatpush2.bf16.msra.mxu0 0
      %595 = vmatprep.subr.bf16.mxu0 0
      %596 = vmatpush2.bf16.msra.mxu0 0
      %597 = vmatprep.subr.bf16.mxu0 0
      %598 = vmatpush2.bf16.msra.mxu0 0
      %599 = vmatprep.subr.bf16.mxu0 0
      %600 = vmatpush2.bf16.msra.mxu0 0
      %601 = vmatprep.subr.bf16.mxu0 0
      %602 = vmatpush2.bf16.msra.mxu0 0
      %603 = vmatprep.mubr.bf16.mxu0 0
      %604 = vmatmul.mubr.bf16.gmra.mxu0 %v513
      %v605 = vpop.f32.mrf.mxu0
      %v606 = vadd.f32 %v521, %v605
      %v607 = vpop.f32.mrf.mxu0
      %v608 = vpop.f32.mrf.mxu0
      %v609 = vadd.f32 %v521, %v608
      %v610 = vpop.f32.mrf.mxu0
      %611 = vmatprep.mubr.bf16.mxu0 0
      %612 = vmatmul.mubr.bf16.gmra.mxu0 %v514
      %v613 = vpop.f32.mrf.mxu0
      %v614 = vadd.f32 %v521, %v613
      %v615 = vpop.f32.mrf.mxu0
      %v616 = vpop.f32.mrf.mxu0
      %v617 = vadd.f32 %v521, %v616
      %v618 = vpop.f32.mrf.mxu0
      %619 = vmatprep.mubr.bf16.mxu0 0
      %620 = vmatmul.mubr.bf16.gmra.mxu0 %v515
      %v621 = vpop.f32.mrf.mxu0
      %v622 = vadd.f32 %v521, %v621
      %v623 = vpop.f32.mrf.mxu0
      %v624 = vpop.f32.mrf.mxu0
      %v625 = vadd.f32 %v521, %v624
      %v626 = vpop.f32.mrf.mxu0
      %627 = vmatprep.mubr.bf16.mxu0 0
      %628 = vmatmul.mubr.bf16.gmra.mxu0 %v516
      %v629 = vpop.f32.mrf.mxu0
      %v630 = vadd.f32 %v521, %v629
      %v631 = vpop.f32.mrf.mxu0
      %v632 = vpop.f32.mrf.mxu0
      %v633 = vadd.f32 %v521, %v632
      %v634 = vpop.f32.mrf.mxu0
      %635 = vdwg.mxu0
      %v636 = vmax.f32 %v606, 0.0
      %v637 = vmax.f32 %v609, 0.0
      %v638 = vmax.f32 %v614, 0.0
      %v639 = vmax.f32 %v617, 0.0
      %v640 = vmax.f32 %v622, 0.0
      %v641 = vmax.f32 %v625, 0.0
      %v642 = vmax.f32 %v630, 0.0
      %v643 = vmax.f32 %v633, 0.0
      %v644 = vmax.f32 %v636, %v637
      %v645 = vmax.f32 %v644, %v638
      %v646 = vmax.f32 %v645, %v639
      %v647 = vmax.f32 %v646, %v640
      %v648 = vmax.f32 %v647, %v641
      %v649 = vmax.f32 %v648, %v642
      %v650 = vmax.f32 %v649, %v643
      %p651 = scmp.eq.s32.totalorder %s24, 0
      // Predicated region
      $region45: #{pointnet_sa_msg_forward.3} parent=43 // pred_check
        %p652 = pneg %p651
      $region46: #{pointnet_sa_msg_forward.3} parent=43 // pred_check_branch
        %654 = sbr.rel (%p652) target = $region48
      $region47: #{pointnet_sa_msg_forward.3} parent=43 // pred_region
        %655 = vst [vmem:[%s331] sm:$0xff] %v650
      $region48: #{pointnet_sa_msg_forward.3} parent=43 // pred_fallthru
        _
      %p656 = scmp.gt.s32.totalorder %s24, 0
      // Predicated region
      $region49: #{pointnet_sa_msg_forward.3} parent=43 // pred_check
        %p657 = pneg %p656
      $region50: #{pointnet_sa_msg_forward.3} parent=43 // pred_check_branch
        %659 = sbr.rel (%p657) target = $region52
      $region51: #{pointnet_sa_msg_forward.3} parent=43 // pred_region
        %v660 = vld [vmem:[%s331] sm:$0xff]
        %v661 = vmax.f32 %v660, %v650
        %662 = vst [vmem:[%s331] sm:$0xff] %v661
      $region52: #{pointnet_sa_msg_forward.3} parent=43 // pred_fallthru
        _
      %p663 = scmp.lt.s32.totalorder %s22, 1
      %s664 = scalar_select %p663, %s22, 1
      %p665 = scmp.lt.s32.totalorder %s23, 0
      %s666 = scalar_select %p665, %s23, 0
      %s667 = sadd.s32 %s666, %s664
      %s668 = smul.addr %s667, 8
      %s669 = scalar_lea.vmem %s6, %s668
      // Predicated region
      $region53: #{pointnet_sa_msg_forward.3} parent=43 // pred_check
        %p670 = pneg %p198
      $region54: #{pointnet_sa_msg_forward.3} parent=43 // pred_check_branch
        %672 = sbr.rel (%p670) target = $region56
      $region55: #{pointnet_sa_msg_forward.3} parent=43 // pred_region
        _
      $region56: #{pointnet_sa_msg_forward.3} parent=43 // pred_fallthru
        _
    $region44: #{pointnet_sa_msg_forward.3} parent=5 // pred_fallthru
      _
    %p673 = scmp.le.s32.totalorder 2, %s12
    // Predicated region
    $region57: #{pointnet_sa_msg_forward.3} parent=5 // pred_check
      %p674 = pneg %p673
    $region58: #{pointnet_sa_msg_forward.3} parent=5 // pred_check_branch
      %676 = sbr.rel (%p674) target = $region60
    $region59: #{pointnet_sa_msg_forward.3} parent=5 // pred_region
      %s677 = ssub.s32 %s12, 2
      // Predicated region
      $region61: #{pointnet_sa_msg_forward.3} parent=59 // pred_check
        %p678 = pneg %p204
      $region62: #{pointnet_sa_msg_forward.3} parent=59 // pred_check_branch
        %680 = sbr.rel (%p678) target = $region64
      $region63: #{pointnet_sa_msg_forward.3} parent=59 // pred_region
        %p681 = scmp.lt.s32.totalorder %s25, 1
        %s682 = scalar_select %p681, %s25, 1
        %p683 = scmp.lt.s32.totalorder %s26, 0
        %s684 = scalar_select %p683, %s26, 0
        %s685 = sadd.s32 %s684, %s682
        %s686 = smul.addr %s685, 8
        %s687 = scalar_lea.vmem %s6, %s686
      $region64: #{pointnet_sa_msg_forward.3} parent=59 // pred_fallthru
        _
    $region60: #{pointnet_sa_msg_forward.3} parent=5 // pred_fallthru
      _
  $region6: #{pointnet_sa_msg_forward.3} parent=0 // loop_footer
    %s16 = sadd.s32 1, %s12
  $region7: #{pointnet_sa_msg_forward.3} parent=0 // loop_footer_branch
    %11 = sbr.rel target = $region3
  $region8: #{pointnet_sa_msg_forward.3} parent=0 // loop_exit
    _

</llo_original>
